<compile_context>
chip_gen: v7x
topology: tpu7x:2x2x1
jax: 0.10.0
libtpu: 0.0.40
codegen_flags: <defaults>
</compile_context>

<pallas_src>
import functools

import jax
import jax.numpy as jnp
from jax.experimental import pallas as pl
from jax.experimental.pallas import tpu as pltpu


_LANE = 128
# Below this many bytes per operand, pallas_call launch + pipeline prologue
# costs more than the multiply itself; fused XLA elementwise wins.
_SMALL_BYTES = 2 << 20


def _mul_kernel(t_ref, v_ref, o_ref):
    # Elementwise product on the current VMEM tile (VPU work).
    o_ref[...] = t_ref[...] * v_ref[...]


def _round_up(x, m):
    return (x + m - 1) // m * m


def _sublane_multiple(dtype):
    # f32 -> 8, bf16/f16 -> 16, int8/fp8 -> 32 (sub-32-bit packs along sublanes).
    itemsize = jnp.dtype(dtype).itemsize
    return 8 * max(1, 4 // itemsize)


def _pick_lane_width(n):
    # Largest lane-dense width (multiple of 128) that exactly divides n.
    for w in (2048, 1024, 512, 256, 128):
        if n % w == 0:
            return w
    return None


@functools.lru_cache(maxsize=1)
def _tpu_config():
    """Returns (target_block_bytes_per_operand, vmem_limit_cap, dual_tensorcore)."""
    vmem_cap = 64 << 20  # conservative default = v7x per-TC VMEM
    try:
        info = pltpu.get_tpu_info()
        vmem_cap = int(getattr(info, "vmem_capacity_bytes", vmem_cap))
    except Exception:
        pass
    # v7x: 64 MiB VMEM per TC and 2 TCs/chip; v5e/v6e: 128 MiB VMEM, 1 TC/chip.
    dual_tc = vmem_cap <= (64 << 20)
    if dual_tc:
        # 4 MiB/operand: 3 arrays x 2 buffers x 4 MiB = 24 MiB << 64 MiB, and
        # drops the fixed per-step overhead share to <10% at 3.2 TB/s HBM.
        return 4 << 20, 48 << 20, True
    # Single-TC chips with 128 MiB VMEM: 2 MiB/operand is already ~86% of
    # roofline; ample VMEM headroom so allow a higher scoped-VMEM cap.
    return 2 << 20, 100 << 20, False


def _fuse_2d(t2d, v2d, block_rows, vmem_cap_limit):
    """Elementwise multiply of two identically shaped (rows, width) arrays."""
    rows, width = t2d.shape
    grid = (pl.cdiv(rows, block_rows),)  # ragged last block handled by Pallas
    spec = pl.BlockSpec((block_rows, width), lambda i: (i, 0))

    block_bytes = block_rows * width * jnp.dtype(t2d.dtype).itemsize
    # 3 arrays x 2 pipeline buffers per block, plus headroom for compiler
    # scratch; capped per-generation (48 MiB on v7x, 100 MiB on v5e/v6e).
    vmem_limit = min(3 * 2 * block_bytes + (16 << 20), vmem_cap_limit)

    return pl.pallas_call(
        _mul_kernel,
        out_shape=jax.ShapeDtypeStruct((rows, width), t2d.dtype),
        grid=grid,
        in_specs=[spec, spec],
        out_specs=spec,
        compiler_params=pltpu.CompilerParams(
            dimension_semantics=("parallel",),
            vmem_limit_bytes=vmem_limit,
        ),
    )(t2d, v2d)


def multiple_fusion(t, v):
    """JAX/Pallas equivalent of multipleFusion.forward(t, v) = t * v."""
    if t.shape != v.shape or t.dtype != v.dtype:
        # Broadcasting / dtype-promotion path: let XLA handle it.
        return t * v

    n = t.size
    itemsize = jnp.dtype(t.dtype).itemsize
    if n * itemsize < _SMALL_BYTES:
        # Small/medium tensors: pallas_call launch + pipeline overhead
        # dominates; plain XLA elementwise is faster and fuses with
        # surrounding ops.
        return t * v

    width = _pick_lane_width(n)
    if width is None:
        # Flat size not a multiple of 128: a lane-dense slab would require
        # padding copies (extra HBM passes on a mem-bound op); fused XLA
        # multiply is the better choice.
        return t * v

    target_block_bytes, vmem_cap_limit, dual_tc = _tpu_config()

    rows = n // width
    sub = _sublane_multiple(t.dtype)

    # Target block size per operand, rounded to the dtype's sublane multiple.
    block_rows = max(sub, (target_block_bytes // (width * itemsize)) // sub * sub)
    block_rows = min(block_rows, _round_up(rows, sub))

    if dual_tc and rows >= 4 * sub:
        # v7x: aim for an even grid with >= 4 blocks so each TensorCore gets
        # >= 2 pipelined steps (prefetch overlaps writeback) and the two cores
        # stay balanced. Single-TC chips skip this (splitting only shrinks the
        # block and doubles per-step overhead).
        nb = max(4, pl.cdiv(rows, block_rows))
        if nb % 2:
            nb += 1
        nb = min(nb, max(1, rows // sub))
        block_rows = max(sub, _round_up(pl.cdiv(rows, nb), sub))

    orig_shape = t.shape
    t2d = t.reshape(rows, width)
    v2d = v.reshape(rows, width)
    out2d = _fuse_2d(t2d, v2d, block_rows, vmem_cap_limit)
    return out2d.reshape(orig_shape)


if __name__ == "__main__":
    key = jax.random.PRNGKey(0)
    k1, k2, k3, k4, k5, k6, k7, k8 = jax.random.split(key, 8)

    # 1) Small NCHW feature map from the module spec (hits the XLA fast path).
    t_small = jax.random.normal(k1, (2, 4, 16, 16), dtype=jnp.float32)
    v_small = jax.random.normal(k2, (2, 4, 16, 16), dtype=jnp.float32)
    out_small = jax.block_until_ready(multiple_fusion(t_small, v_small))
    assert out_small.shape == t_small.shape
    assert jnp.allclose(out_small, t_small * v_small, atol=1e-6, rtol=1e-6)

    # 2) Larger feature map that exercises the Pallas kernel (8 MiB/operand).
    t_big = jax.random.normal(k3, (2, 64, 128, 128), dtype=jnp.float32)
    v_big = jax.random.normal(k4, (2, 64, 128, 128), dtype=jnp.float32)
    out_big = jax.block_until_ready(multiple_fusion(t_big, v_big))
    assert out_big.shape == t_big.shape
    assert jnp.allclose(out_big, t_big * v_big, atol=1e-6, rtol=1e-6)

    # 3) Shape whose row count is not a multiple of the block rows
    #    (exercises the ragged last grid block on the Pallas path).
    t_rag = jax.random.normal(k5, (2, 36, 96, 128), dtype=jnp.float32)
    v_rag = jax.random.normal(k6, (2, 36, 96, 128), dtype=jnp.float32)
    out_rag = jax.block_until_ready(multiple_fusion(t_rag, v_rag))
    assert out_rag.shape == t_rag.shape
    assert jnp.allclose(out_rag, t_rag * v_rag, atol=1e-6, rtol=1e-6)

    # 4) bf16 path (sublane multiple of 16) through the Pallas kernel.
    t_bf = jax.random.normal(k7, (2, 64, 128, 128), dtype=jnp.bfloat16)
    v_bf = jax.random.normal(k8, (2, 64, 128, 128), dtype=jnp.bfloat16)
    out_bf = jax.block_until_ready(multiple_fusion(t_bf, v_bf))
    assert out_bf.shape == t_bf.shape
    assert jnp.allclose(out_bf.astype(jnp.float32),
                        (t_bf * v_bf).astype(jnp.float32),
                        atol=1e-2, rtol=1e-2)

    print("KERNEL_OK")
</pallas_src>

<mosaic_0001>
module attributes {stable_mosaic.version = 11 : i64} {
  func.func @_mul_kernel(%arg0: i32, %arg1: memref<256x2048xf32, #tpu.memory_space<vmem>>, %arg2: memref<256x2048xf32, #tpu.memory_space<vmem>>, %arg3: memref<256x2048xf32, #tpu.memory_space<vmem>>) attributes {dimension_semantics = [#tpu.dimension_semantics<parallel>], iteration_bounds = array<i64: 4>, scalar_prefetch = 0 : i64, scratch_operands = 0 : i64, tpu.core_type = #tpu.core_type<tc>, window_params = [{transform_indices = @transform_0, window_bounds = array<i64: 256, 2048>}, {transform_indices = @transform_1, window_bounds = array<i64: 256, 2048>}, {transform_indices = @transform_2, window_bounds = array<i64: 256, 2048>}]} {
    %c0 = arith.constant 0 : index
    %c0_0 = arith.constant 0 : index
    %0 = vector.load %arg1[%c0, %c0_0] : memref<256x2048xf32, #tpu.memory_space<vmem>>, vector<256x2048xf32>
    %c0_1 = arith.constant 0 : index
    %c0_2 = arith.constant 0 : index
    %1 = vector.load %arg2[%c0_1, %c0_2] : memref<256x2048xf32, #tpu.memory_space<vmem>>, vector<256x2048xf32>
    %2 = arith.mulf %0, %1 : vector<256x2048xf32>
    %c0_3 = arith.constant 0 : index
    %c0_4 = arith.constant 0 : index
    %3 = vector.load %arg3[%c0_3, %c0_4] : memref<256x2048xf32, #tpu.memory_space<vmem>>, vector<256x2048xf32>
    tpu.vector_store %arg3[%c0_3, %c0_4], %2 {strides = array<i32>} : memref<256x2048xf32, #tpu.memory_space<vmem>>, vector<256x2048xf32>,
    return
  }
  func.func @transform_0(%arg0: i32) -> (i32, i32) {
    %c0_i32 = arith.constant 0 : i32
    %c0_i32_0 = arith.constant 0 : i32
    return %arg0, %c0_i32 : i32, i32
  }
  func.func @transform_1(%arg0: i32) -> (i32, i32) {
    %c0_i32 = arith.constant 0 : i32
    %c0_i32_0 = arith.constant 0 : i32
    return %arg0, %c0_i32 : i32, i32
  }
  func.func @transform_2(%arg0: i32) -> (i32, i32) {
    %c0_i32 = arith.constant 0 : i32
    %c0_i32_0 = arith.constant 0 : i32
    return %arg0, %c0_i32 : i32, i32
  }
}

</mosaic_0001>

<llo_original>
// kernel: tpu_custom_call.1
$region0: #{tpu_custom_call.1}
  #allocation0 [shape = 'u32[]', space=smem, size = 0x4, offset = 0x4, fixed_abs, tag = 'smem constant byte address 0x4 - core index']
  #allocation1 [shape = 'u32[144,128]{1,0:T(1,128)}', space=vmem, size = 0x12000, scoped, tag = 'internal scratch']
  %s0 = inlined_call_operand.hbm [shape: f32[1024,2048], index: 0, kind: input, shape index: {}]
  %s1 = inlined_call_operand.hbm [shape: f32[1024,2048], index: 1, kind: input, shape index: {}]
  %s2 = inlined_call_operand.hbm [shape: f32[1024,2048], index: 2, kind: output, shape index: {}]
  %s3 = sld [smem:[#allocation0]]
  $region49: #{tpu_custom_call.1} parent=0
    _
  %s5 = ssub.s32 1, %s3
  %s6 = scalar_select 0, %s5, %s3
  $region1: #{tpu_custom_call.1} parent=0
    #allocation2 [shape = 'u8[4194304]{0}', space=vmem, size = 0x400000, scoped, tag = 'input window, operand 0']
    #allocation3 [shape = 's32[2]{0}', space=sflag, size = 0x8, scoped, tag = 'scoped memory for tpu_custom_call.1']
    #allocation4 [shape = 's32[2]{0}', space=sflag, size = 0x8, scoped, tag = 'scoped memory for tpu_custom_call.1']
    #allocation5 [shape = 'u8[4194304]{0}', space=vmem, size = 0x400000, scoped, tag = 'input window, operand 1']
    #allocation6 [shape = 's32[2]{0}', space=sflag, size = 0x8, scoped, tag = 'scoped memory for tpu_custom_call.1']
    #allocation7 [shape = 'u8[4194304]{0}', space=vmem, size = 0x400000, scoped, tag = 'output window, operand 0']
    %7 = vsyncpa [#allocation3], 0
    %s8 = scalar_lea.sflag [#allocation3], 1
    %9 = vsyncpa %s8, 0
    %10 = vsyncpa [#allocation6], 0
    %s11 = scalar_lea.sflag [#allocation6], 1
    %12 = vsyncpa %s11, 0
    %13 = vsyncpa [#allocation4], 0
    %s14 = scalar_lea.sflag [#allocation4], 1
    %15 = vsyncpa %s14, 0
    loop: start=0, step=1, limit=6
    $region2: #{tpu_custom_call.1} parent=1 // loop_pre_header
      _
    $region3: #{tpu_custom_call.1} parent=1 // loop_header
      %s17 = sphi 0, %s21
      %p18 = scmp.ge.s32.totalorder %s17, 6
      %s27 = sphi 0, %s29
      %s30 = sphi 0, %s27
      %s31 = sphi 0, %s30
      %s47 = sphi 0, %s31
      %s53 = sphi 0, %s55
      %s56 = sphi 0, %s53
      %s57 = sphi 0, %s56
      %s73 = sphi 0, %s57
      %s79 = sphi 0, %s81
      %s82 = sphi 0, %s79
      %s83 = sphi 0, %s82
      %s99 = sphi 0, %s83
    $region4: #{tpu_custom_call.1} parent=1 // loop_header_branch
      %20 = sbr.rel (%p18) target = $region8
    $region5: #{tpu_custom_call.1} parent=1 // loop_body
      %s22 = ssub.s32 %s17, 1
      %s23 = ssub.s32 %s17, 2
      %s24 = sadd.s32 %s17, 1
      %s25 = ssub.s32 %s17, %s24
      %p26 = scmp.eq.s32.totalorder %s25, 0
      %s28 = sadd.s32 %s27, 1
      %s29 = scalar_select %p26, %s27, %s28
      %p32 = pneg %p26
      %p33 = scmp.eq.s32.totalorder %s17, 3
      %p34 = por %p32, %p33
      %p35 = scmp.ne.s32.totalorder %s27, %s30
      %p36 = scmp.eq.s32.totalorder %s17, 0
      %p37 = por %p35, %p36
      %p38 = scmp.ne.s32.totalorder %s27, %s30
      %p39 = scmp.eq.s32.totalorder %s22, 3
      %p40 = por %p38, %p39
      %p41 = scmp.ne.s32.totalorder %s30, %s31
      %p42 = scmp.eq.s32.totalorder %s22, 0
      %p43 = por %p41, %p42
      %p44 = scmp.ne.s32.totalorder %s30, %s31
      %p45 = scmp.eq.s32.totalorder %s23, 3
      %p46 = por %p44, %p45
      %p48 = scmp.ne.s32.totalorder %s31, %s47
      %p49 = scmp.eq.s32.totalorder %s23, 0
      %p50 = por %p48, %p49
      %s51 = ssub.s32 %s17, %s24
      %p52 = scmp.eq.s32.totalorder %s51, 0
      %s54 = sadd.s32 %s53, 1
      %s55 = scalar_select %p52, %s53, %s54
      %p58 = pneg %p52
      %p59 = scmp.eq.s32.totalorder %s17, 3
      %p60 = por %p58, %p59
      %p61 = scmp.ne.s32.totalorder %s53, %s56
      %p62 = scmp.eq.s32.totalorder %s17, 0
      %p63 = por %p61, %p62
      %p64 = scmp.ne.s32.totalorder %s53, %s56
      %p65 = scmp.eq.s32.totalorder %s22, 3
      %p66 = por %p64, %p65
      %p67 = scmp.ne.s32.totalorder %s56, %s57
      %p68 = scmp.eq.s32.totalorder %s22, 0
      %p69 = por %p67, %p68
      %p70 = scmp.ne.s32.totalorder %s56, %s57
      %p71 = scmp.eq.s32.totalorder %s23, 3
      %p72 = por %p70, %p71
      %p74 = scmp.ne.s32.totalorder %s57, %s73
      %p75 = scmp.eq.s32.totalorder %s23, 0
      %p76 = por %p74, %p75
      %s77 = ssub.s32 %s17, %s24
      %p78 = scmp.eq.s32.totalorder %s77, 0
      %s80 = sadd.s32 %s79, 1
      %s81 = scalar_select %p78, %s79, %s80
      %p84 = pneg %p78
      %p85 = scmp.eq.s32.totalorder %s17, 3
      %p86 = por %p84, %p85
      %p87 = scmp.ne.s32.totalorder %s79, %s82
      %p88 = scmp.eq.s32.totalorder %s17, 0
      %p89 = por %p87, %p88
      %p90 = scmp.ne.s32.totalorder %s79, %s82
      %p91 = scmp.eq.s32.totalorder %s22, 3
      %p92 = por %p90, %p91
      %p93 = scmp.ne.s32.totalorder %s82, %s83
      %p94 = scmp.eq.s32.totalorder %s22, 0
      %p95 = por %p93, %p94
      %p96 = scmp.ne.s32.totalorder %s82, %s83
      %p97 = scmp.eq.s32.totalorder %s23, 3
      %p98 = por %p96, %p97
      %p100 = scmp.ne.s32.totalorder %s83, %s99
      %p101 = scmp.eq.s32.totalorder %s23, 0
      %p102 = por %p100, %p101
      %p103 = scmp.le.s32.totalorder 1, %s17
      %p104 = scmp.lt.s32.totalorder %s17, 5
      %p105 = pnand %p103, %p104
      %p106 = pneg %p105
      // Predicated region
      $region9: #{tpu_custom_call.1} parent=5 // pred_check
        _
      $region10: #{tpu_custom_call.1} parent=5 // pred_check_branch
        %108 = sbr.rel (%p105) target = $region12
      $region11: #{tpu_custom_call.1} parent=5 // pred_region
        %s109 = ssub.s32 %s17, 1
      $region12: #{tpu_custom_call.1} parent=5 // pred_fallthru
        _
      %p110 = scmp.lt.s32.totalorder %s17, 4
      // Predicated region
      $region13: #{tpu_custom_call.1} parent=5 // pred_check
        %p111 = pneg %p110
      $region14: #{tpu_custom_call.1} parent=5 // pred_check_branch
        %113 = sbr.rel (%p111) target = $region16
      $region15: #{tpu_custom_call.1} parent=5 // pred_region
        // Predicated region
        $region17: #{tpu_custom_call.1} parent=15 // pred_check
          %p114 = pneg %p37
        $region18: #{tpu_custom_call.1} parent=15 // pred_check_branch
          %116 = sbr.rel (%p114) target = $region20
        $region19: #{tpu_custom_call.1} parent=15 // pred_region
          %s117 = sand.u32 %s27, 1
          %s118 = scalar_lea.sflag [#allocation3], %s117
          %s119 = sand.u32 %s27, 1
          %s120 = smul.addr %s119, 4096
          %s121 = scalar_lea.vmem [#allocation2], %s120
          %s122 = smul.u32 32, %s17
          %s124 = ssub.s32 65536, 65536
          %125 = vsyncadd %s118, %s124
          %s126 = smul.addr %s122, 16
          %s127 = smul.addr %s126, 128
          %s128 = scalar_lea.hbm %s0, %s127
          %s129 = sshll.u32 %s121, 4
          %s130 = int_to_ptr.vmem [resolvable:$true] %s129
          %135 = dma.hbm_to_vmem [thread:$0]  %s128, 65536, %s130, %s118, 2048, 2048, 128
        $region20: #{tpu_custom_call.1} parent=15 // pred_fallthru
          _
        // Predicated region
        $region21: #{tpu_custom_call.1} parent=15 // pred_check
          %p136 = pneg %p63
        $region22: #{tpu_custom_call.1} parent=15 // pred_check_branch
          %138 = sbr.rel (%p136) target = $region24
        $region23: #{tpu_custom_call.1} parent=15 // pred_region
          %s139 = sand.u32 %s53, 1
          %s140 = scalar_lea.sflag [#allocation6], %s139
          %s141 = sand.u32 %s53, 1
          %s142 = smul.addr %s141, 4096
          %s143 = scalar_lea.vmem [#allocation5], %s142
          %s144 = smul.u32 32, %s17
          %s146 = ssub.s32 65536, 65536
          %147 = vsyncadd %s140, %s146
          %s148 = smul.addr %s144, 16
          %s149 = smul.addr %s148, 128
          %s150 = scalar_lea.hbm %s1, %s149
          %s151 = sshll.u32 %s143, 4
          %s152 = int_to_ptr.vmem [resolvable:$true] %s151
          %157 = dma.hbm_to_vmem [thread:$0]  %s150, 65536, %s152, %s140, 2048, 2048, 128
        $region24: #{tpu_custom_call.1} parent=15 // pred_fallthru
          _
      $region16: #{tpu_custom_call.1} parent=5 // pred_fallthru
        _
      %p158 = scmp.le.s32.totalorder 1, %s17
      %p159 = scmp.lt.s32.totalorder %s17, 5
      %p160 = pnand %p158, %p159
      %p161 = pneg %p160
      // Predicated region
      $region25: #{tpu_custom_call.1} parent=5 // pred_check
        _
      $region26: #{tpu_custom_call.1} parent=5 // pred_check_branch
        %163 = sbr.rel (%p160) target = $region28
      $region27: #{tpu_custom_call.1} parent=5 // pred_region
        %s164 = ssub.s32 %s17, 1
        %s165 = sand.u32 %s30, 1
        %s166 = scalar_lea.sflag [#allocation3], %s165
        %s167 = sand.u32 %s30, 1
        %s168 = smul.addr %s167, 4096
        %s169 = scalar_lea.vmem [#allocation2], %s168
        // Predicated region
        $region29: #{tpu_custom_call.1} parent=27 // pred_check
          %p170 = pneg %p43
        $region30: #{tpu_custom_call.1} parent=27 // pred_check_branch
          %172 = sbr.rel (%p170) target = $region32
        $region31: #{tpu_custom_call.1} parent=27 // pred_region
          %173 = dma.done %s166, 65536
        $region32: #{tpu_custom_call.1} parent=27 // pred_fallthru
          _
        %s174 = sand.u32 %s56, 1
        %s175 = scalar_lea.sflag [#allocation6], %s174
        %s176 = sand.u32 %s56, 1
        %s177 = smul.addr %s176, 4096
        %s178 = scalar_lea.vmem [#allocation5], %s177
        // Predicated region
        $region33: #{tpu_custom_call.1} parent=27 // pred_check
          %p179 = pneg %p69
        $region34: #{tpu_custom_call.1} parent=27 // pred_check_branch
          %181 = sbr.rel (%p179) target = $region36
        $region35: #{tpu_custom_call.1} parent=27 // pred_region
          %182 = dma.done %s175, 65536
        $region36: #{tpu_custom_call.1} parent=27 // pred_fallthru
          _
        %s183 = sand.u32 %s30, 1
        %s184 = scalar_lea.sflag [#allocation3], %s183
        %s185 = sand.u32 %s30, 1
        %s186 = smul.addr %s185, 4096
        %s187 = scalar_lea.vmem [#allocation2], %s186
        %p188 = pneg %p43
        %p189 = pneg %p40
        %s190 = sand.u32 %s56, 1
        %s191 = scalar_lea.sflag [#allocation6], %s190
        %s192 = sand.u32 %s56, 1
        %s193 = smul.addr %s192, 4096
        %s194 = scalar_lea.vmem [#allocation5], %s193
        %p195 = pneg %p69
        %p196 = pneg %p66
        %p197 = pneg %p95
        %p198 = pneg %p92
        %s199 = sand.u32 %s82, 1
        %s200 = scalar_lea.sflag [#allocation4], %s199
        %s201 = sand.u32 %s82, 1
        %s202 = smul.addr %s201, 4096
        %s203 = scalar_lea.vmem [#allocation7], %s202
        %s204 = smul.u32 32, %s22
        %s205 = smul.u32 32, %s22
        %s206 = smul.u32 32, %s22
        %v207 = vld [vmem:[%s169] sm:$0xff]
        %v208 = vld [vmem:[%s169 + $0x8] sm:$0xff]
        %v209 = vld [vmem:[%s169 + $0x10] sm:$0xff]
        %v210 = vld [vmem:[%s169 + $0x18] sm:$0xff]
        %v211 = vld [vmem:[%s169 + $0x20] sm:$0xff]
        %v212 = vld [vmem:[%s169 + $0x28] sm:$0xff]
        %v213 = vld [vmem:[%s169 + $0x30] sm:$0xff]
        %v214 = vld [vmem:[%s169 + $0x38] sm:$0xff]
        %v215 = vld [vmem:[%s169 + $0x40] sm:$0xff]
        %v216 = vld [vmem:[%s169 + $0x48] sm:$0xff]
        %v217 = vld [vmem:[%s169 + $0x50] sm:$0xff]
        %v218 = vld [vmem:[%s169 + $0x58] sm:$0xff]
        %v219 = vld [vmem:[%s169 + $0x60] sm:$0xff]
        %v220 = vld [vmem:[%s169 + $0x68] sm:$0xff]
        %v221 = vld [vmem:[%s169 + $0x70] sm:$0xff]
        %v222 = vld [vmem:[%s169 + $0x78] sm:$0xff]
        %v223 = vld [vmem:[%s169 + $0x80] sm:$0xff]
        %v224 = vld [vmem:[%s169 + $0x88] sm:$0xff]
        %v225 = vld [vmem:[%s169 + $0x90] sm:$0xff]
        %v226 = vld [vmem:[%s169 + $0x98] sm:$0xff]
        %v227 = vld [vmem:[%s169 + $0xa0] sm:$0xff]
        %v228 = vld [vmem:[%s169 + $0xa8] sm:$0xff]
        %v229 = vld [vmem:[%s169 + $0xb0] sm:$0xff]
        %v230 = vld [vmem:[%s169 + $0xb8] sm:$0xff]
        %v231 = vld [vmem:[%s169 + $0xc0] sm:$0xff]
        %v232 = vld [vmem:[%s169 + $0xc8] sm:$0xff]
        %v233 = vld [vmem:[%s169 + $0xd0] sm:$0xff]
        %v234 = vld [vmem:[%s169 + $0xd8] sm:$0xff]
        %v235 = vld [vmem:[%s169 + $0xe0] sm:$0xff]
        %v236 = vld [vmem:[%s169 + $0xe8] sm:$0xff]
        %v237 = vld [vmem:[%s169 + $0xf0] sm:$0xff]
        %v238 = vld [vmem:[%s169 + $0xf8] sm:$0xff]
        %v239 = vld [vmem:[%s169 + $0x100] sm:$0xff]
        %v240 = vld [vmem:[%s169 + $0x108] sm:$0xff]
        %v241 = vld [vmem:[%s169 + $0x110] sm:$0xff]
        %v242 = vld [vmem:[%s169 + $0x118] sm:$0xff]
        %v243 = vld [vmem:[%s169 + $0x120] sm:$0xff]
        %v244 = vld [vmem:[%s169 + $0x128] sm:$0xff]
        %v245 = vld [vmem:[%s169 + $0x130] sm:$0xff]
        %v246 = vld [vmem:[%s169 + $0x138] sm:$0xff]
        %v247 = vld [vmem:[%s169 + $0x140] sm:$0xff]
        %v248 = vld [vmem:[%s169 + $0x148] sm:$0xff]
        %v249 = vld [vmem:[%s169 + $0x150] sm:$0xff]
        %v250 = vld [vmem:[%s169 + $0x158] sm:$0xff]
        %v251 = vld [vmem:[%s169 + $0x160] sm:$0xff]
        %v252 = vld [vmem:[%s169 + $0x168] sm:$0xff]
        %v253 = vld [vmem:[%s169 + $0x170] sm:$0xff]
        %v254 = vld [vmem:[%s169 + $0x178] sm:$0xff]
        %v255 = vld [vmem:[%s169 + $0x180] sm:$0xff]
        %v256 = vld [vmem:[%s169 + $0x188] sm:$0xff]
        %v257 = vld [vmem:[%s169 + $0x190] sm:$0xff]
        %v258 = vld [vmem:[%s169 + $0x198] sm:$0xff]
        %v259 = vld [vmem:[%s169 + $0x1a0] sm:$0xff]
        %v260 = vld [vmem:[%s169 + $0x1a8] sm:$0xff]
        %v261 = vld [vmem:[%s169 + $0x1b0] sm:$0xff]
        %v262 = vld [vmem:[%s169 + $0x1b8] sm:$0xff]
        %v263 = vld [vmem:[%s169 + $0x1c0] sm:$0xff]
        %v264 = vld [vmem:[%s169 + $0x1c8] sm:$0xff]
        %v265 = vld [vmem:[%s169 + $0x1d0] sm:$0xff]
        %v266 = vld [vmem:[%s169 + $0x1d8] sm:$0xff]
        %v267 = vld [vmem:[%s169 + $0x1e0] sm:$0xff]
        %v268 = vld [vmem:[%s169 + $0x1e8] sm:$0xff]
        %v269 = vld [vmem:[%s169 + $0x1f0] sm:$0xff]
        %v270 = vld [vmem:[%s169 + $0x1f8] sm:$0xff]
        %v271 = vld [vmem:[%s169 + $0x200] sm:$0xff]
        %v272 = vld [vmem:[%s169 + $0x208] sm:$0xff]
        %v273 = vld [vmem:[%s169 + $0x210] sm:$0xff]
        %v274 = vld [vmem:[%s169 + $0x218] sm:$0xff]
        %v275 = vld [vmem:[%s169 + $0x220] sm:$0xff]
        %v276 = vld [vmem:[%s169 + $0x228] sm:$0xff]
        %v277 = vld [vmem:[%s169 + $0x230] sm:$0xff]
        %v278 = vld [vmem:[%s169 + $0x238] sm:$0xff]
        %v279 = vld [vmem:[%s169 + $0x240] sm:$0xff]
        %v280 = vld [vmem:[%s169 + $0x248] sm:$0xff]
        %v281 = vld [vmem:[%s169 + $0x250] sm:$0xff]
        %v282 = vld [vmem:[%s169 + $0x258] sm:$0xff]
        %v283 = vld [vmem:[%s169 + $0x260] sm:$0xff]
        %v284 = vld [vmem:[%s169 + $0x268] sm:$0xff]
        %v285 = vld [vmem:[%s169 + $0x270] sm:$0xff]
        %v286 = vld [vmem:[%s169 + $0x278] sm:$0xff]
        %v287 = vld [vmem:[%s169 + $0x280] sm:$0xff]
        %v288 = vld [vmem:[%s169 + $0x288] sm:$0xff]
        %v289 = vld [vmem:[%s169 + $0x290] sm:$0xff]
        %v290 = vld [vmem:[%s169 + $0x298] sm:$0xff]
        %v291 = vld [vmem:[%s169 + $0x2a0] sm:$0xff]
        %v292 = vld [vmem:[%s169 + $0x2a8] sm:$0xff]
        %v293 = vld [vmem:[%s169 + $0x2b0] sm:$0xff]
        %v294 = vld [vmem:[%s169 + $0x2b8] sm:$0xff]
        %v295 = vld [vmem:[%s169 + $0x2c0] sm:$0xff]
        %v296 = vld [vmem:[%s169 + $0x2c8] sm:$0xff]
        %v297 = vld [vmem:[%s169 + $0x2d0] sm:$0xff]
        %v298 = vld [vmem:[%s169 + $0x2d8] sm:$0xff]
        %v299 = vld [vmem:[%s169 + $0x2e0] sm:$0xff]
        %v300 = vld [vmem:[%s169 + $0x2e8] sm:$0xff]
        %v301 = vld [vmem:[%s169 + $0x2f0] sm:$0xff]
        %v302 = vld [vmem:[%s169 + $0x2f8] sm:$0xff]
        %v303 = vld [vmem:[%s169 + $0x300] sm:$0xff]
        %v304 = vld [vmem:[%s169 + $0x308] sm:$0xff]
        %v305 = vld [vmem:[%s169 + $0x310] sm:$0xff]
        %v306 = vld [vmem:[%s169 + $0x318] sm:$0xff]
        %v307 = vld [vmem:[%s169 + $0x320] sm:$0xff]
        %v308 = vld [vmem:[%s169 + $0x328] sm:$0xff]
        %v309 = vld [vmem:[%s169 + $0x330] sm:$0xff]
        %v310 = vld [vmem:[%s169 + $0x338] sm:$0xff]
        %v311 = vld [vmem:[%s169 + $0x340] sm:$0xff]
        %v312 = vld [vmem:[%s169 + $0x348] sm:$0xff]
        %v313 = vld [vmem:[%s169 + $0x350] sm:$0xff]
        %v314 = vld [vmem:[%s169 + $0x358] sm:$0xff]
        %v315 = vld [vmem:[%s169 + $0x360] sm:$0xff]
        %v316 = vld [vmem:[%s169 + $0x368] sm:$0xff]
        %v317 = vld [vmem:[%s169 + $0x370] sm:$0xff]
        %v318 = vld [vmem:[%s169 + $0x378] sm:$0xff]
        %v319 = vld [vmem:[%s169 + $0x380] sm:$0xff]
        %v320 = vld [vmem:[%s169 + $0x388] sm:$0xff]
        %v321 = vld [vmem:[%s169 + $0x390] sm:$0xff]
        %v322 = vld [vmem:[%s169 + $0x398] sm:$0xff]
        %v323 = vld [vmem:[%s169 + $0x3a0] sm:$0xff]
        %v324 = vld [vmem:[%s169 + $0x3a8] sm:$0xff]
        %v325 = vld [vmem:[%s169 + $0x3b0] sm:$0xff]
        %v326 = vld [vmem:[%s169 + $0x3b8] sm:$0xff]
        %v327 = vld [vmem:[%s169 + $0x3c0] sm:$0xff]
        %v328 = vld [vmem:[%s169 + $0x3c8] sm:$0xff]
        %v329 = vld [vmem:[%s169 + $0x3d0] sm:$0xff]
        %v330 = vld [vmem:[%s169 + $0x3d8] sm:$0xff]
        %v331 = vld [vmem:[%s169 + $0x3e0] sm:$0xff]
        %v332 = vld [vmem:[%s169 + $0x3e8] sm:$0xff]
        %v333 = vld [vmem:[%s169 + $0x3f0] sm:$0xff]
        %v334 = vld [vmem:[%s169 + $0x3f8] sm:$0xff]
        %v335 = vld [vmem:[%s169 + $0x400] sm:$0xff]
        %v336 = vld [vmem:[%s169 + $0x408] sm:$0xff]
        %v337 = vld [vmem:[%s169 + $0x410] sm:$0xff]
        %v338 = vld [vmem:[%s169 + $0x418] sm:$0xff]
        %v339 = vld [vmem:[%s169 + $0x420] sm:$0xff]
        %v340 = vld [vmem:[%s169 + $0x428] sm:$0xff]
        %v341 = vld [vmem:[%s169 + $0x430] sm:$0xff]
        %v342 = vld [vmem:[%s169 + $0x438] sm:$0xff]
        %v343 = vld [vmem:[%s169 + $0x440] sm:$0xff]
        %v344 = vld [vmem:[%s169 + $0x448] sm:$0xff]
        %v345 = vld [vmem:[%s169 + $0x450] sm:$0xff]
        %v346 = vld [vmem:[%s169 + $0x458] sm:$0xff]
        %v347 = vld [vmem:[%s169 + $0x460] sm:$0xff]
        %v348 = vld [vmem:[%s169 + $0x468] sm:$0xff]
        %v349 = vld [vmem:[%s169 + $0x470] sm:$0xff]
        %v350 = vld [vmem:[%s169 + $0x478] sm:$0xff]
        %v351 = vld [vmem:[%s169 + $0x480] sm:$0xff]
        %v352 = vld [vmem:[%s169 + $0x488] sm:$0xff]
        %v353 = vld [vmem:[%s169 + $0x490] sm:$0xff]
        %v354 = vld [vmem:[%s169 + $0x498] sm:$0xff]
        %v355 = vld [vmem:[%s169 + $0x4a0] sm:$0xff]
        %v356 = vld [vmem:[%s169 + $0x4a8] sm:$0xff]
        %v357 = vld [vmem:[%s169 + $0x4b0] sm:$0xff]
        %v358 = vld [vmem:[%s169 + $0x4b8] sm:$0xff]
        %v359 = vld [vmem:[%s169 + $0x4c0] sm:$0xff]
        %v360 = vld [vmem:[%s169 + $0x4c8] sm:$0xff]
        %v361 = vld [vmem:[%s169 + $0x4d0] sm:$0xff]
        %v362 = vld [vmem:[%s169 + $0x4d8] sm:$0xff]
        %v363 = vld [vmem:[%s169 + $0x4e0] sm:$0xff]
        %v364 = vld [vmem:[%s169 + $0x4e8] sm:$0xff]
        %v365 = vld [vmem:[%s169 + $0x4f0] sm:$0xff]
        %v366 = vld [vmem:[%s169 + $0x4f8] sm:$0xff]
        %v367 = vld [vmem:[%s169 + $0x500] sm:$0xff]
        %v368 = vld [vmem:[%s169 + $0x508] sm:$0xff]
        %v369 = vld [vmem:[%s169 + $0x510] sm:$0xff]
        %v370 = vld [vmem:[%s169 + $0x518] sm:$0xff]
        %v371 = vld [vmem:[%s169 + $0x520] sm:$0xff]
        %v372 = vld [vmem:[%s169 + $0x528] sm:$0xff]
        %v373 = vld [vmem:[%s169 + $0x530] sm:$0xff]
        %v374 = vld [vmem:[%s169 + $0x538] sm:$0xff]
        %v375 = vld [vmem:[%s169 + $0x540] sm:$0xff]
        %v376 = vld [vmem:[%s169 + $0x548] sm:$0xff]
        %v377 = vld [vmem:[%s169 + $0x550] sm:$0xff]
        %v378 = vld [vmem:[%s169 + $0x558] sm:$0xff]
        %v379 = vld [vmem:[%s169 + $0x560] sm:$0xff]
        %v380 = vld [vmem:[%s169 + $0x568] sm:$0xff]
        %v381 = vld [vmem:[%s169 + $0x570] sm:$0xff]
        %v382 = vld [vmem:[%s169 + $0x578] sm:$0xff]
        %v383 = vld [vmem:[%s169 + $0x580] sm:$0xff]
        %v384 = vld [vmem:[%s169 + $0x588] sm:$0xff]
        %v385 = vld [vmem:[%s169 + $0x590] sm:$0xff]
        %v386 = vld [vmem:[%s169 + $0x598] sm:$0xff]
        %v387 = vld [vmem:[%s169 + $0x5a0] sm:$0xff]
        %v388 = vld [vmem:[%s169 + $0x5a8] sm:$0xff]
        %v389 = vld [vmem:[%s169 + $0x5b0] sm:$0xff]
        %v390 = vld [vmem:[%s169 + $0x5b8] sm:$0xff]
        %v391 = vld [vmem:[%s169 + $0x5c0] sm:$0xff]
        %v392 = vld [vmem:[%s169 + $0x5c8] sm:$0xff]
        %v393 = vld [vmem:[%s169 + $0x5d0] sm:$0xff]
        %v394 = vld [vmem:[%s169 + $0x5d8] sm:$0xff]
        %v395 = vld [vmem:[%s169 + $0x5e0] sm:$0xff]
        %v396 = vld [vmem:[%s169 + $0x5e8] sm:$0xff]
        %v397 = vld [vmem:[%s169 + $0x5f0] sm:$0xff]
        %v398 = vld [vmem:[%s169 + $0x5f8] sm:$0xff]
        %v399 = vld [vmem:[%s169 + $0x600] sm:$0xff]
        %v400 = vld [vmem:[%s169 + $0x608] sm:$0xff]
        %v401 = vld [vmem:[%s169 + $0x610] sm:$0xff]
        %v402 = vld [vmem:[%s169 + $0x618] sm:$0xff]
        %v403 = vld [vmem:[%s169 + $0x620] sm:$0xff]
        %v404 = vld [vmem:[%s169 + $0x628] sm:$0xff]
        %v405 = vld [vmem:[%s169 + $0x630] sm:$0xff]
        %v406 = vld [vmem:[%s169 + $0x638] sm:$0xff]
        %v407 = vld [vmem:[%s169 + $0x640] sm:$0xff]
        %v408 = vld [vmem:[%s169 + $0x648] sm:$0xff]
        %v409 = vld [vmem:[%s169 + $0x650] sm:$0xff]
        %v410 = vld [vmem:[%s169 + $0x658] sm:$0xff]
        %v411 = vld [vmem:[%s169 + $0x660] sm:$0xff]
        %v412 = vld [vmem:[%s169 + $0x668] sm:$0xff]
        %v413 = vld [vmem:[%s169 + $0x670] sm:$0xff]
        %v414 = vld [vmem:[%s169 + $0x678] sm:$0xff]
        %v415 = vld [vmem:[%s169 + $0x680] sm:$0xff]
        %v416 = vld [vmem:[%s169 + $0x688] sm:$0xff]
        %v417 = vld [vmem:[%s169 + $0x690] sm:$0xff]
        %v418 = vld [vmem:[%s169 + $0x698] sm:$0xff]
        %v419 = vld [vmem:[%s169 + $0x6a0] sm:$0xff]
        %v420 = vld [vmem:[%s169 + $0x6a8] sm:$0xff]
        %v421 = vld [vmem:[%s169 + $0x6b0] sm:$0xff]
        %v422 = vld [vmem:[%s169 + $0x6b8] sm:$0xff]
        %v423 = vld [vmem:[%s169 + $0x6c0] sm:$0xff]
        %v424 = vld [vmem:[%s169 + $0x6c8] sm:$0xff]
        %v425 = vld [vmem:[%s169 + $0x6d0] sm:$0xff]
        %v426 = vld [vmem:[%s169 + $0x6d8] sm:$0xff]
        %v427 = vld [vmem:[%s169 + $0x6e0] sm:$0xff]
        %v428 = vld [vmem:[%s169 + $0x6e8] sm:$0xff]
        %v429 = vld [vmem:[%s169 + $0x6f0] sm:$0xff]
        %v430 = vld [vmem:[%s169 + $0x6f8] sm:$0xff]
        %v431 = vld [vmem:[%s169 + $0x700] sm:$0xff]
        %v432 = vld [vmem:[%s169 + $0x708] sm:$0xff]
        %v433 = vld [vmem:[%s169 + $0x710] sm:$0xff]
        %v434 = vld [vmem:[%s169 + $0x718] sm:$0xff]
        %v435 = vld [vmem:[%s169 + $0x720] sm:$0xff]
        %v436 = vld [vmem:[%s169 + $0x728] sm:$0xff]
        %v437 = vld [vmem:[%s169 + $0x730] sm:$0xff]
        %v438 = vld [vmem:[%s169 + $0x738] sm:$0xff]
        %v439 = vld [vmem:[%s169 + $0x740] sm:$0xff]
        %v440 = vld [vmem:[%s169 + $0x748] sm:$0xff]
        %v441 = vld [vmem:[%s169 + $0x750] sm:$0xff]
        %v442 = vld [vmem:[%s169 + $0x758] sm:$0xff]
        %v443 = vld [vmem:[%s169 + $0x760] sm:$0xff]
        %v444 = vld [vmem:[%s169 + $0x768] sm:$0xff]
        %v445 = vld [vmem:[%s169 + $0x770] sm:$0xff]
        %v446 = vld [vmem:[%s169 + $0x778] sm:$0xff]
        %v447 = vld [vmem:[%s169 + $0x780] sm:$0xff]
        %v448 = vld [vmem:[%s169 + $0x788] sm:$0xff]
        %v449 = vld [vmem:[%s169 + $0x790] sm:$0xff]
        %v450 = vld [vmem:[%s169 + $0x798] sm:$0xff]
        %v451 = vld [vmem:[%s169 + $0x7a0] sm:$0xff]
        %v452 = vld [vmem:[%s169 + $0x7a8] sm:$0xff]
        %v453 = vld [vmem:[%s169 + $0x7b0] sm:$0xff]
        %v454 = vld [vmem:[%s169 + $0x7b8] sm:$0xff]
        %v455 = vld [vmem:[%s169 + $0x7c0] sm:$0xff]
        %v456 = vld [vmem:[%s169 + $0x7c8] sm:$0xff]
        %v457 = vld [vmem:[%s169 + $0x7d0] sm:$0xff]
        %v458 = vld [vmem:[%s169 + $0x7d8] sm:$0xff]
        %v459 = vld [vmem:[%s169 + $0x7e0] sm:$0xff]
        %v460 = vld [vmem:[%s169 + $0x7e8] sm:$0xff]
        %v461 = vld [vmem:[%s169 + $0x7f0] sm:$0xff]
        %v462 = vld [vmem:[%s169 + $0x7f8] sm:$0xff]
        %v463 = vld [vmem:[%s169 + $0x800] sm:$0xff]
        %v464 = vld [vmem:[%s169 + $0x808] sm:$0xff]
        %v465 = vld [vmem:[%s169 + $0x810] sm:$0xff]
        %v466 = vld [vmem:[%s169 + $0x818] sm:$0xff]
        %v467 = vld [vmem:[%s169 + $0x820] sm:$0xff]
        %v468 = vld [vmem:[%s169 + $0x828] sm:$0xff]
        %v469 = vld [vmem:[%s169 + $0x830] sm:$0xff]
        %v470 = vld [vmem:[%s169 + $0x838] sm:$0xff]
        %v471 = vld [vmem:[%s169 + $0x840] sm:$0xff]
        %v472 = vld [vmem:[%s169 + $0x848] sm:$0xff]
        %v473 = vld [vmem:[%s169 + $0x850] sm:$0xff]
        %v474 = vld [vmem:[%s169 + $0x858] sm:$0xff]
        %v475 = vld [vmem:[%s169 + $0x860] sm:$0xff]
        %v476 = vld [vmem:[%s169 + $0x868] sm:$0xff]
        %v477 = vld [vmem:[%s169 + $0x870] sm:$0xff]
        %v478 = vld [vmem:[%s169 + $0x878] sm:$0xff]
        %v479 = vld [vmem:[%s169 + $0x880] sm:$0xff]
        %v480 = vld [vmem:[%s169 + $0x888] sm:$0xff]
        %v481 = vld [vmem:[%s169 + $0x890] sm:$0xff]
        %v482 = vld [vmem:[%s169 + $0x898] sm:$0xff]
        %v483 = vld [vmem:[%s169 + $0x8a0] sm:$0xff]
        %v484 = vld [vmem:[%s169 + $0x8a8] sm:$0xff]
        %v485 = vld [vmem:[%s169 + $0x8b0] sm:$0xff]
        %v486 = vld [vmem:[%s169 + $0x8b8] sm:$0xff]
        %v487 = vld [vmem:[%s169 + $0x8c0] sm:$0xff]
        %v488 = vld [vmem:[%s169 + $0x8c8] sm:$0xff]
        %v489 = vld [vmem:[%s169 + $0x8d0] sm:$0xff]
        %v490 = vld [vmem:[%s169 + $0x8d8] sm:$0xff]
        %v491 = vld [vmem:[%s169 + $0x8e0] sm:$0xff]
        %v492 = vld [vmem:[%s169 + $0x8e8] sm:$0xff]
        %v493 = vld [vmem:[%s169 + $0x8f0] sm:$0xff]
        %v494 = vld [vmem:[%s169 + $0x8f8] sm:$0xff]
        %v495 = vld [vmem:[%s169 + $0x900] sm:$0xff]
        %v496 = vld [vmem:[%s169 + $0x908] sm:$0xff]
        %v497 = vld [vmem:[%s169 + $0x910] sm:$0xff]
        %v498 = vld [vmem:[%s169 + $0x918] sm:$0xff]
        %v499 = vld [vmem:[%s169 + $0x920] sm:$0xff]
        %v500 = vld [vmem:[%s169 + $0x928] sm:$0xff]
        %v501 = vld [vmem:[%s169 + $0x930] sm:$0xff]
        %v502 = vld [vmem:[%s169 + $0x938] sm:$0xff]
        %v503 = vld [vmem:[%s169 + $0x940] sm:$0xff]
        %v504 = vld [vmem:[%s169 + $0x948] sm:$0xff]
        %v505 = vld [vmem:[%s169 + $0x950] sm:$0xff]
        %v506 = vld [vmem:[%s169 + $0x958] sm:$0xff]
        %v507 = vld [vmem:[%s169 + $0x960] sm:$0xff]
        %v508 = vld [vmem:[%s169 + $0x968] sm:$0xff]
        %v509 = vld [vmem:[%s169 + $0x970] sm:$0xff]
        %v510 = vld [vmem:[%s169 + $0x978] sm:$0xff]
        %v511 = vld [vmem:[%s169 + $0x980] sm:$0xff]
        %v512 = vld [vmem:[%s169 + $0x988] sm:$0xff]
        %v513 = vld [vmem:[%s169 + $0x990] sm:$0xff]
        %v514 = vld [vmem:[%s169 + $0x998] sm:$0xff]
        %v515 = vld [vmem:[%s169 + $0x9a0] sm:$0xff]
        %v516 = vld [vmem:[%s169 + $0x9a8] sm:$0xff]
        %v517 = vld [vmem:[%s169 + $0x9b0] sm:$0xff]
        %v518 = vld [vmem:[%s169 + $0x9b8] sm:$0xff]
        %v519 = vld [vmem:[%s169 + $0x9c0] sm:$0xff]
        %v520 = vld [vmem:[%s169 + $0x9c8] sm:$0xff]
        %v521 = vld [vmem:[%s169 + $0x9d0] sm:$0xff]
        %v522 = vld [vmem:[%s169 + $0x9d8] sm:$0xff]
        %v523 = vld [vmem:[%s169 + $0x9e0] sm:$0xff]
        %v524 = vld [vmem:[%s169 + $0x9e8] sm:$0xff]
        %v525 = vld [vmem:[%s169 + $0x9f0] sm:$0xff]
        %v526 = vld [vmem:[%s169 + $0x9f8] sm:$0xff]
        %v527 = vld [vmem:[%s169 + $0xa00] sm:$0xff]
        %v528 = vld [vmem:[%s169 + $0xa08] sm:$0xff]
        %v529 = vld [vmem:[%s169 + $0xa10] sm:$0xff]
        %v530 = vld [vmem:[%s169 + $0xa18] sm:$0xff]
        %v531 = vld [vmem:[%s169 + $0xa20] sm:$0xff]
        %v532 = vld [vmem:[%s169 + $0xa28] sm:$0xff]
        %v533 = vld [vmem:[%s169 + $0xa30] sm:$0xff]
        %v534 = vld [vmem:[%s169 + $0xa38] sm:$0xff]
        %v535 = vld [vmem:[%s169 + $0xa40] sm:$0xff]
        %v536 = vld [vmem:[%s169 + $0xa48] sm:$0xff]
        %v537 = vld [vmem:[%s169 + $0xa50] sm:$0xff]
        %v538 = vld [vmem:[%s169 + $0xa58] sm:$0xff]
        %v539 = vld [vmem:[%s169 + $0xa60] sm:$0xff]
        %v540 = vld [vmem:[%s169 + $0xa68] sm:$0xff]
        %v541 = vld [vmem:[%s169 + $0xa70] sm:$0xff]
        %v542 = vld [vmem:[%s169 + $0xa78] sm:$0xff]
        %v543 = vld [vmem:[%s169 + $0xa80] sm:$0xff]
        %v544 = vld [vmem:[%s169 + $0xa88] sm:$0xff]
        %v545 = vld [vmem:[%s169 + $0xa90] sm:$0xff]
        %v546 = vld [vmem:[%s169 + $0xa98] sm:$0xff]
        %v547 = vld [vmem:[%s169 + $0xaa0] sm:$0xff]
        %v548 = vld [vmem:[%s169 + $0xaa8] sm:$0xff]
        %v549 = vld [vmem:[%s169 + $0xab0] sm:$0xff]
        %v550 = vld [vmem:[%s169 + $0xab8] sm:$0xff]
        %v551 = vld [vmem:[%s169 + $0xac0] sm:$0xff]
        %v552 = vld [vmem:[%s169 + $0xac8] sm:$0xff]
        %v553 = vld [vmem:[%s169 + $0xad0] sm:$0xff]
        %v554 = vld [vmem:[%s169 + $0xad8] sm:$0xff]
        %v555 = vld [vmem:[%s169 + $0xae0] sm:$0xff]
        %v556 = vld [vmem:[%s169 + $0xae8] sm:$0xff]
        %v557 = vld [vmem:[%s169 + $0xaf0] sm:$0xff]
        %v558 = vld [vmem:[%s169 + $0xaf8] sm:$0xff]
        %v559 = vld [vmem:[%s169 + $0xb00] sm:$0xff]
        %v560 = vld [vmem:[%s169 + $0xb08] sm:$0xff]
        %v561 = vld [vmem:[%s169 + $0xb10] sm:$0xff]
        %v562 = vld [vmem:[%s169 + $0xb18] sm:$0xff]
        %v563 = vld [vmem:[%s169 + $0xb20] sm:$0xff]
        %v564 = vld [vmem:[%s169 + $0xb28] sm:$0xff]
        %v565 = vld [vmem:[%s169 + $0xb30] sm:$0xff]
        %v566 = vld [vmem:[%s169 + $0xb38] sm:$0xff]
        %v567 = vld [vmem:[%s169 + $0xb40] sm:$0xff]
        %v568 = vld [vmem:[%s169 + $0xb48] sm:$0xff]
        %v569 = vld [vmem:[%s169 + $0xb50] sm:$0xff]
        %v570 = vld [vmem:[%s169 + $0xb58] sm:$0xff]
        %v571 = vld [vmem:[%s169 + $0xb60] sm:$0xff]
        %v572 = vld [vmem:[%s169 + $0xb68] sm:$0xff]
        %v573 = vld [vmem:[%s169 + $0xb70] sm:$0xff]
        %v574 = vld [vmem:[%s169 + $0xb78] sm:$0xff]
        %v575 = vld [vmem:[%s169 + $0xb80] sm:$0xff]
        %v576 = vld [vmem:[%s169 + $0xb88] sm:$0xff]
        %v577 = vld [vmem:[%s169 + $0xb90] sm:$0xff]
        %v578 = vld [vmem:[%s169 + $0xb98] sm:$0xff]
        %v579 = vld [vmem:[%s169 + $0xba0] sm:$0xff]
        %v580 = vld [vmem:[%s169 + $0xba8] sm:$0xff]
        %v581 = vld [vmem:[%s169 + $0xbb0] sm:$0xff]
        %v582 = vld [vmem:[%s169 + $0xbb8] sm:$0xff]
        %v583 = vld [vmem:[%s169 + $0xbc0] sm:$0xff]
        %v584 = vld [vmem:[%s169 + $0xbc8] sm:$0xff]
        %v585 = vld [vmem:[%s169 + $0xbd0] sm:$0xff]
        %v586 = vld [vmem:[%s169 + $0xbd8] sm:$0xff]
        %v587 = vld [vmem:[%s169 + $0xbe0] sm:$0xff]
        %v588 = vld [vmem:[%s169 + $0xbe8] sm:$0xff]
        %v589 = vld [vmem:[%s169 + $0xbf0] sm:$0xff]
        %v590 = vld [vmem:[%s169 + $0xbf8] sm:$0xff]
        %v591 = vld [vmem:[%s169 + $0xc00] sm:$0xff]
        %v592 = vld [vmem:[%s169 + $0xc08] sm:$0xff]
        %v593 = vld [vmem:[%s169 + $0xc10] sm:$0xff]
        %v594 = vld [vmem:[%s169 + $0xc18] sm:$0xff]
        %v595 = vld [vmem:[%s169 + $0xc20] sm:$0xff]
        %v596 = vld [vmem:[%s169 + $0xc28] sm:$0xff]
        %v597 = vld [vmem:[%s169 + $0xc30] sm:$0xff]
        %v598 = vld [vmem:[%s169 + $0xc38] sm:$0xff]
        %v599 = vld [vmem:[%s169 + $0xc40] sm:$0xff]
        %v600 = vld [vmem:[%s169 + $0xc48] sm:$0xff]
        %v601 = vld [vmem:[%s169 + $0xc50] sm:$0xff]
        %v602 = vld [vmem:[%s169 + $0xc58] sm:$0xff]
        %v603 = vld [vmem:[%s169 + $0xc60] sm:$0xff]
        %v604 = vld [vmem:[%s169 + $0xc68] sm:$0xff]
        %v605 = vld [vmem:[%s169 + $0xc70] sm:$0xff]
        %v606 = vld [vmem:[%s169 + $0xc78] sm:$0xff]
        %v607 = vld [vmem:[%s169 + $0xc80] sm:$0xff]
        %v608 = vld [vmem:[%s169 + $0xc88] sm:$0xff]
        %v609 = vld [vmem:[%s169 + $0xc90] sm:$0xff]
        %v610 = vld [vmem:[%s169 + $0xc98] sm:$0xff]
        %v611 = vld [vmem:[%s169 + $0xca0] sm:$0xff]
        %v612 = vld [vmem:[%s169 + $0xca8] sm:$0xff]
        %v613 = vld [vmem:[%s169 + $0xcb0] sm:$0xff]
        %v614 = vld [vmem:[%s169 + $0xcb8] sm:$0xff]
        %v615 = vld [vmem:[%s169 + $0xcc0] sm:$0xff]
        %v616 = vld [vmem:[%s169 + $0xcc8] sm:$0xff]
        %v617 = vld [vmem:[%s169 + $0xcd0] sm:$0xff]
        %v618 = vld [vmem:[%s169 + $0xcd8] sm:$0xff]
        %v619 = vld [vmem:[%s169 + $0xce0] sm:$0xff]
        %v620 = vld [vmem:[%s169 + $0xce8] sm:$0xff]
        %v621 = vld [vmem:[%s169 + $0xcf0] sm:$0xff]
        %v622 = vld [vmem:[%s169 + $0xcf8] sm:$0xff]
        %v623 = vld [vmem:[%s169 + $0xd00] sm:$0xff]
        %v624 = vld [vmem:[%s169 + $0xd08] sm:$0xff]
        %v625 = vld [vmem:[%s169 + $0xd10] sm:$0xff]
        %v626 = vld [vmem:[%s169 + $0xd18] sm:$0xff]
        %v627 = vld [vmem:[%s169 + $0xd20] sm:$0xff]
        %v628 = vld [vmem:[%s169 + $0xd28] sm:$0xff]
        %v629 = vld [vmem:[%s169 + $0xd30] sm:$0xff]
        %v630 = vld [vmem:[%s169 + $0xd38] sm:$0xff]
        %v631 = vld [vmem:[%s169 + $0xd40] sm:$0xff]
        %v632 = vld [vmem:[%s169 + $0xd48] sm:$0xff]
        %v633 = vld [vmem:[%s169 + $0xd50] sm:$0xff]
        %v634 = vld [vmem:[%s169 + $0xd58] sm:$0xff]
        %v635 = vld [vmem:[%s169 + $0xd60] sm:$0xff]
        %v636 = vld [vmem:[%s169 + $0xd68] sm:$0xff]
        %v637 = vld [vmem:[%s169 + $0xd70] sm:$0xff]
        %v638 = vld [vmem:[%s169 + $0xd78] sm:$0xff]
        %v639 = vld [vmem:[%s169 + $0xd80] sm:$0xff]
        %v640 = vld [vmem:[%s169 + $0xd88] sm:$0xff]
        %v641 = vld [vmem:[%s169 + $0xd90] sm:$0xff]
        %v642 = vld [vmem:[%s169 + $0xd98] sm:$0xff]
        %v643 = vld [vmem:[%s169 + $0xda0] sm:$0xff]
        %v644 = vld [vmem:[%s169 + $0xda8] sm:$0xff]
        %v645 = vld [vmem:[%s169 + $0xdb0] sm:$0xff]
        %v646 = vld [vmem:[%s169 + $0xdb8] sm:$0xff]
        %v647 = vld [vmem:[%s169 + $0xdc0] sm:$0xff]
        %v648 = vld [vmem:[%s169 + $0xdc8] sm:$0xff]
        %v649 = vld [vmem:[%s169 + $0xdd0] sm:$0xff]
        %v650 = vld [vmem:[%s169 + $0xdd8] sm:$0xff]
        %v651 = vld [vmem:[%s169 + $0xde0] sm:$0xff]
        %v652 = vld [vmem:[%s169 + $0xde8] sm:$0xff]
        %v653 = vld [vmem:[%s169 + $0xdf0] sm:$0xff]
        %v654 = vld [vmem:[%s169 + $0xdf8] sm:$0xff]
        %v655 = vld [vmem:[%s169 + $0xe00] sm:$0xff]
        %v656 = vld [vmem:[%s169 + $0xe08] sm:$0xff]
        %v657 = vld [vmem:[%s169 + $0xe10] sm:$0xff]
        %v658 = vld [vmem:[%s169 + $0xe18] sm:$0xff]
        %v659 = vld [vmem:[%s169 + $0xe20] sm:$0xff]
        %v660 = vld [vmem:[%s169 + $0xe28] sm:$0xff]
        %v661 = vld [vmem:[%s169 + $0xe30] sm:$0xff]
        %v662 = vld [vmem:[%s169 + $0xe38] sm:$0xff]
        %v663 = vld [vmem:[%s169 + $0xe40] sm:$0xff]
        %v664 = vld [vmem:[%s169 + $0xe48] sm:$0xff]
        %v665 = vld [vmem:[%s169 + $0xe50] sm:$0xff]
        %v666 = vld [vmem:[%s169 + $0xe58] sm:$0xff]
        %v667 = vld [vmem:[%s169 + $0xe60] sm:$0xff]
        %v668 = vld [vmem:[%s169 + $0xe68] sm:$0xff]
        %v669 = vld [vmem:[%s169 + $0xe70] sm:$0xff]
        %v670 = vld [vmem:[%s169 + $0xe78] sm:$0xff]
        %v671 = vld [vmem:[%s169 + $0xe80] sm:$0xff]
        %v672 = vld [vmem:[%s169 + $0xe88] sm:$0xff]
        %v673 = vld [vmem:[%s169 + $0xe90] sm:$0xff]
        %v674 = vld [vmem:[%s169 + $0xe98] sm:$0xff]
        %v675 = vld [vmem:[%s169 + $0xea0] sm:$0xff]
        %v676 = vld [vmem:[%s169 + $0xea8] sm:$0xff]
        %v677 = vld [vmem:[%s169 + $0xeb0] sm:$0xff]
        %v678 = vld [vmem:[%s169 + $0xeb8] sm:$0xff]
        %v679 = vld [vmem:[%s169 + $0xec0] sm:$0xff]
        %v680 = vld [vmem:[%s169 + $0xec8] sm:$0xff]
        %v681 = vld [vmem:[%s169 + $0xed0] sm:$0xff]
        %v682 = vld [vmem:[%s169 + $0xed8] sm:$0xff]
        %v683 = vld [vmem:[%s169 + $0xee0] sm:$0xff]
        %v684 = vld [vmem:[%s169 + $0xee8] sm:$0xff]
        %v685 = vld [vmem:[%s169 + $0xef0] sm:$0xff]
        %v686 = vld [vmem:[%s169 + $0xef8] sm:$0xff]
        %v687 = vld [vmem:[%s169 + $0xf00] sm:$0xff]
        %v688 = vld [vmem:[%s169 + $0xf08] sm:$0xff]
        %v689 = vld [vmem:[%s169 + $0xf10] sm:$0xff]
        %v690 = vld [vmem:[%s169 + $0xf18] sm:$0xff]
        %v691 = vld [vmem:[%s169 + $0xf20] sm:$0xff]
        %v692 = vld [vmem:[%s169 + $0xf28] sm:$0xff]
        %v693 = vld [vmem:[%s169 + $0xf30] sm:$0xff]
        %v694 = vld [vmem:[%s169 + $0xf38] sm:$0xff]
        %v695 = vld [vmem:[%s169 + $0xf40] sm:$0xff]
        %v696 = vld [vmem:[%s169 + $0xf48] sm:$0xff]
        %v697 = vld [vmem:[%s169 + $0xf50] sm:$0xff]
        %v698 = vld [vmem:[%s169 + $0xf58] sm:$0xff]
        %v699 = vld [vmem:[%s169 + $0xf60] sm:$0xff]
        %v700 = vld [vmem:[%s169 + $0xf68] sm:$0xff]
        %v701 = vld [vmem:[%s169 + $0xf70] sm:$0xff]
        %v702 = vld [vmem:[%s169 + $0xf78] sm:$0xff]
        %v703 = vld [vmem:[%s169 + $0xf80] sm:$0xff]
        %v704 = vld [vmem:[%s169 + $0xf88] sm:$0xff]
        %v705 = vld [vmem:[%s169 + $0xf90] sm:$0xff]
        %v706 = vld [vmem:[%s169 + $0xf98] sm:$0xff]
        %v707 = vld [vmem:[%s169 + $0xfa0] sm:$0xff]
        %v708 = vld [vmem:[%s169 + $0xfa8] sm:$0xff]
        %v709 = vld [vmem:[%s169 + $0xfb0] sm:$0xff]
        %v710 = vld [vmem:[%s169 + $0xfb8] sm:$0xff]
        %v711 = vld [vmem:[%s169 + $0xfc0] sm:$0xff]
        %v712 = vld [vmem:[%s169 + $0xfc8] sm:$0xff]
        %v713 = vld [vmem:[%s169 + $0xfd0] sm:$0xff]
        %v714 = vld [vmem:[%s169 + $0xfd8] sm:$0xff]
        %v715 = vld [vmem:[%s169 + $0xfe0] sm:$0xff]
        %v716 = vld [vmem:[%s169 + $0xfe8] sm:$0xff]
        %v717 = vld [vmem:[%s169 + $0xff0] sm:$0xff]
        %v718 = vld [vmem:[%s169 + $0xff8] sm:$0xff]
        %v719 = vld [vmem:[%s178] sm:$0xff]
        %v720 = vld [vmem:[%s178 + $0x8] sm:$0xff]
        %v721 = vld [vmem:[%s178 + $0x10] sm:$0xff]
        %v722 = vld [vmem:[%s178 + $0x18] sm:$0xff]
        %v723 = vld [vmem:[%s178 + $0x20] sm:$0xff]
        %v724 = vld [vmem:[%s178 + $0x28] sm:$0xff]
        %v725 = vld [vmem:[%s178 + $0x30] sm:$0xff]
        %v726 = vld [vmem:[%s178 + $0x38] sm:$0xff]
        %v727 = vld [vmem:[%s178 + $0x40] sm:$0xff]
        %v728 = vld [vmem:[%s178 + $0x48] sm:$0xff]
        %v729 = vld [vmem:[%s178 + $0x50] sm:$0xff]
        %v730 = vld [vmem:[%s178 + $0x58] sm:$0xff]
        %v731 = vld [vmem:[%s178 + $0x60] sm:$0xff]
        %v732 = vld [vmem:[%s178 + $0x68] sm:$0xff]
        %v733 = vld [vmem:[%s178 + $0x70] sm:$0xff]
        %v734 = vld [vmem:[%s178 + $0x78] sm:$0xff]
        %v735 = vld [vmem:[%s178 + $0x80] sm:$0xff]
        %v736 = vld [vmem:[%s178 + $0x88] sm:$0xff]
        %v737 = vld [vmem:[%s178 + $0x90] sm:$0xff]
        %v738 = vld [vmem:[%s178 + $0x98] sm:$0xff]
        %v739 = vld [vmem:[%s178 + $0xa0] sm:$0xff]
        %v740 = vld [vmem:[%s178 + $0xa8] sm:$0xff]
        %v741 = vld [vmem:[%s178 + $0xb0] sm:$0xff]
        %v742 = vld [vmem:[%s178 + $0xb8] sm:$0xff]
        %v743 = vld [vmem:[%s178 + $0xc0] sm:$0xff]
        %v744 = vld [vmem:[%s178 + $0xc8] sm:$0xff]
        %v745 = vld [vmem:[%s178 + $0xd0] sm:$0xff]
        %v746 = vld [vmem:[%s178 + $0xd8] sm:$0xff]
        %v747 = vld [vmem:[%s178 + $0xe0] sm:$0xff]
        %v748 = vld [vmem:[%s178 + $0xe8] sm:$0xff]
        %v749 = vld [vmem:[%s178 + $0xf0] sm:$0xff]
        %v750 = vld [vmem:[%s178 + $0xf8] sm:$0xff]
        %v751 = vld [vmem:[%s178 + $0x100] sm:$0xff]
        %v752 = vld [vmem:[%s178 + $0x108] sm:$0xff]
        %v753 = vld [vmem:[%s178 + $0x110] sm:$0xff]
        %v754 = vld [vmem:[%s178 + $0x118] sm:$0xff]
        %v755 = vld [vmem:[%s178 + $0x120] sm:$0xff]
        %v756 = vld [vmem:[%s178 + $0x128] sm:$0xff]
        %v757 = vld [vmem:[%s178 + $0x130] sm:$0xff]
        %v758 = vld [vmem:[%s178 + $0x138] sm:$0xff]
        %v759 = vld [vmem:[%s178 + $0x140] sm:$0xff]
        %v760 = vld [vmem:[%s178 + $0x148] sm:$0xff]
        %v761 = vld [vmem:[%s178 + $0x150] sm:$0xff]
        %v762 = vld [vmem:[%s178 + $0x158] sm:$0xff]
        %v763 = vld [vmem:[%s178 + $0x160] sm:$0xff]
        %v764 = vld [vmem:[%s178 + $0x168] sm:$0xff]
        %v765 = vld [vmem:[%s178 + $0x170] sm:$0xff]
        %v766 = vld [vmem:[%s178 + $0x178] sm:$0xff]
        %v767 = vld [vmem:[%s178 + $0x180] sm:$0xff]
        %v768 = vld [vmem:[%s178 + $0x188] sm:$0xff]
        %v769 = vld [vmem:[%s178 + $0x190] sm:$0xff]
        %v770 = vld [vmem:[%s178 + $0x198] sm:$0xff]
        %v771 = vld [vmem:[%s178 + $0x1a0] sm:$0xff]
        %v772 = vld [vmem:[%s178 + $0x1a8] sm:$0xff]
        %v773 = vld [vmem:[%s178 + $0x1b0] sm:$0xff]
        %v774 = vld [vmem:[%s178 + $0x1b8] sm:$0xff]
        %v775 = vld [vmem:[%s178 + $0x1c0] sm:$0xff]
        %v776 = vld [vmem:[%s178 + $0x1c8] sm:$0xff]
        %v777 = vld [vmem:[%s178 + $0x1d0] sm:$0xff]
        %v778 = vld [vmem:[%s178 + $0x1d8] sm:$0xff]
        %v779 = vld [vmem:[%s178 + $0x1e0] sm:$0xff]
        %v780 = vld [vmem:[%s178 + $0x1e8] sm:$0xff]
        %v781 = vld [vmem:[%s178 + $0x1f0] sm:$0xff]
        %v782 = vld [vmem:[%s178 + $0x1f8] sm:$0xff]
        %v783 = vld [vmem:[%s178 + $0x200] sm:$0xff]
        %v784 = vld [vmem:[%s178 + $0x208] sm:$0xff]
        %v785 = vld [vmem:[%s178 + $0x210] sm:$0xff]
        %v786 = vld [vmem:[%s178 + $0x218] sm:$0xff]
        %v787 = vld [vmem:[%s178 + $0x220] sm:$0xff]
        %v788 = vld [vmem:[%s178 + $0x228] sm:$0xff]
        %v789 = vld [vmem:[%s178 + $0x230] sm:$0xff]
        %v790 = vld [vmem:[%s178 + $0x238] sm:$0xff]
        %v791 = vld [vmem:[%s178 + $0x240] sm:$0xff]
        %v792 = vld [vmem:[%s178 + $0x248] sm:$0xff]
        %v793 = vld [vmem:[%s178 + $0x250] sm:$0xff]
        %v794 = vld [vmem:[%s178 + $0x258] sm:$0xff]
        %v795 = vld [vmem:[%s178 + $0x260] sm:$0xff]
        %v796 = vld [vmem:[%s178 + $0x268] sm:$0xff]
        %v797 = vld [vmem:[%s178 + $0x270] sm:$0xff]
        %v798 = vld [vmem:[%s178 + $0x278] sm:$0xff]
        %v799 = vld [vmem:[%s178 + $0x280] sm:$0xff]
        %v800 = vld [vmem:[%s178 + $0x288] sm:$0xff]
        %v801 = vld [vmem:[%s178 + $0x290] sm:$0xff]
        %v802 = vld [vmem:[%s178 + $0x298] sm:$0xff]
        %v803 = vld [vmem:[%s178 + $0x2a0] sm:$0xff]
        %v804 = vld [vmem:[%s178 + $0x2a8] sm:$0xff]
        %v805 = vld [vmem:[%s178 + $0x2b0] sm:$0xff]
        %v806 = vld [vmem:[%s178 + $0x2b8] sm:$0xff]
        %v807 = vld [vmem:[%s178 + $0x2c0] sm:$0xff]
        %v808 = vld [vmem:[%s178 + $0x2c8] sm:$0xff]
        %v809 = vld [vmem:[%s178 + $0x2d0] sm:$0xff]
        %v810 = vld [vmem:[%s178 + $0x2d8] sm:$0xff]
        %v811 = vld [vmem:[%s178 + $0x2e0] sm:$0xff]
        %v812 = vld [vmem:[%s178 + $0x2e8] sm:$0xff]
        %v813 = vld [vmem:[%s178 + $0x2f0] sm:$0xff]
        %v814 = vld [vmem:[%s178 + $0x2f8] sm:$0xff]
        %v815 = vld [vmem:[%s178 + $0x300] sm:$0xff]
        %v816 = vld [vmem:[%s178 + $0x308] sm:$0xff]
        %v817 = vld [vmem:[%s178 + $0x310] sm:$0xff]
        %v818 = vld [vmem:[%s178 + $0x318] sm:$0xff]
        %v819 = vld [vmem:[%s178 + $0x320] sm:$0xff]
        %v820 = vld [vmem:[%s178 + $0x328] sm:$0xff]
        %v821 = vld [vmem:[%s178 + $0x330] sm:$0xff]
        %v822 = vld [vmem:[%s178 + $0x338] sm:$0xff]
        %v823 = vld [vmem:[%s178 + $0x340] sm:$0xff]
        %v824 = vld [vmem:[%s178 + $0x348] sm:$0xff]
        %v825 = vld [vmem:[%s178 + $0x350] sm:$0xff]
        %v826 = vld [vmem:[%s178 + $0x358] sm:$0xff]
        %v827 = vld [vmem:[%s178 + $0x360] sm:$0xff]
        %v828 = vld [vmem:[%s178 + $0x368] sm:$0xff]
        %v829 = vld [vmem:[%s178 + $0x370] sm:$0xff]
        %v830 = vld [vmem:[%s178 + $0x378] sm:$0xff]
        %v831 = vld [vmem:[%s178 + $0x380] sm:$0xff]
        %v832 = vld [vmem:[%s178 + $0x388] sm:$0xff]
        %v833 = vld [vmem:[%s178 + $0x390] sm:$0xff]
        %v834 = vld [vmem:[%s178 + $0x398] sm:$0xff]
        %v835 = vld [vmem:[%s178 + $0x3a0] sm:$0xff]
        %v836 = vld [vmem:[%s178 + $0x3a8] sm:$0xff]
        %v837 = vld [vmem:[%s178 + $0x3b0] sm:$0xff]
        %v838 = vld [vmem:[%s178 + $0x3b8] sm:$0xff]
        %v839 = vld [vmem:[%s178 + $0x3c0] sm:$0xff]
        %v840 = vld [vmem:[%s178 + $0x3c8] sm:$0xff]
        %v841 = vld [vmem:[%s178 + $0x3d0] sm:$0xff]
        %v842 = vld [vmem:[%s178 + $0x3d8] sm:$0xff]
        %v843 = vld [vmem:[%s178 + $0x3e0] sm:$0xff]
        %v844 = vld [vmem:[%s178 + $0x3e8] sm:$0xff]
        %v845 = vld [vmem:[%s178 + $0x3f0] sm:$0xff]
        %v846 = vld [vmem:[%s178 + $0x3f8] sm:$0xff]
        %v847 = vld [vmem:[%s178 + $0x400] sm:$0xff]
        %v848 = vld [vmem:[%s178 + $0x408] sm:$0xff]
        %v849 = vld [vmem:[%s178 + $0x410] sm:$0xff]
        %v850 = vld [vmem:[%s178 + $0x418] sm:$0xff]
        %v851 = vld [vmem:[%s178 + $0x420] sm:$0xff]
        %v852 = vld [vmem:[%s178 + $0x428] sm:$0xff]
        %v853 = vld [vmem:[%s178 + $0x430] sm:$0xff]
        %v854 = vld [vmem:[%s178 + $0x438] sm:$0xff]
        %v855 = vld [vmem:[%s178 + $0x440] sm:$0xff]
        %v856 = vld [vmem:[%s178 + $0x448] sm:$0xff]
        %v857 = vld [vmem:[%s178 + $0x450] sm:$0xff]
        %v858 = vld [vmem:[%s178 + $0x458] sm:$0xff]
        %v859 = vld [vmem:[%s178 + $0x460] sm:$0xff]
        %v860 = vld [vmem:[%s178 + $0x468] sm:$0xff]
        %v861 = vld [vmem:[%s178 + $0x470] sm:$0xff]
        %v862 = vld [vmem:[%s178 + $0x478] sm:$0xff]
        %v863 = vld [vmem:[%s178 + $0x480] sm:$0xff]
        %v864 = vld [vmem:[%s178 + $0x488] sm:$0xff]
        %v865 = vld [vmem:[%s178 + $0x490] sm:$0xff]
        %v866 = vld [vmem:[%s178 + $0x498] sm:$0xff]
        %v867 = vld [vmem:[%s178 + $0x4a0] sm:$0xff]
        %v868 = vld [vmem:[%s178 + $0x4a8] sm:$0xff]
        %v869 = vld [vmem:[%s178 + $0x4b0] sm:$0xff]
        %v870 = vld [vmem:[%s178 + $0x4b8] sm:$0xff]
        %v871 = vld [vmem:[%s178 + $0x4c0] sm:$0xff]
        %v872 = vld [vmem:[%s178 + $0x4c8] sm:$0xff]
        %v873 = vld [vmem:[%s178 + $0x4d0] sm:$0xff]
        %v874 = vld [vmem:[%s178 + $0x4d8] sm:$0xff]
        %v875 = vld [vmem:[%s178 + $0x4e0] sm:$0xff]
        %v876 = vld [vmem:[%s178 + $0x4e8] sm:$0xff]
        %v877 = vld [vmem:[%s178 + $0x4f0] sm:$0xff]
        %v878 = vld [vmem:[%s178 + $0x4f8] sm:$0xff]
        %v879 = vld [vmem:[%s178 + $0x500] sm:$0xff]
        %v880 = vld [vmem:[%s178 + $0x508] sm:$0xff]
        %v881 = vld [vmem:[%s178 + $0x510] sm:$0xff]
        %v882 = vld [vmem:[%s178 + $0x518] sm:$0xff]
        %v883 = vld [vmem:[%s178 + $0x520] sm:$0xff]
        %v884 = vld [vmem:[%s178 + $0x528] sm:$0xff]
        %v885 = vld [vmem:[%s178 + $0x530] sm:$0xff]
        %v886 = vld [vmem:[%s178 + $0x538] sm:$0xff]
        %v887 = vld [vmem:[%s178 + $0x540] sm:$0xff]
        %v888 = vld [vmem:[%s178 + $0x548] sm:$0xff]
        %v889 = vld [vmem:[%s178 + $0x550] sm:$0xff]
        %v890 = vld [vmem:[%s178 + $0x558] sm:$0xff]
        %v891 = vld [vmem:[%s178 + $0x560] sm:$0xff]
        %v892 = vld [vmem:[%s178 + $0x568] sm:$0xff]
        %v893 = vld [vmem:[%s178 + $0x570] sm:$0xff]
        %v894 = vld [vmem:[%s178 + $0x578] sm:$0xff]
        %v895 = vld [vmem:[%s178 + $0x580] sm:$0xff]
        %v896 = vld [vmem:[%s178 + $0x588] sm:$0xff]
        %v897 = vld [vmem:[%s178 + $0x590] sm:$0xff]
        %v898 = vld [vmem:[%s178 + $0x598] sm:$0xff]
        %v899 = vld [vmem:[%s178 + $0x5a0] sm:$0xff]
        %v900 = vld [vmem:[%s178 + $0x5a8] sm:$0xff]
        %v901 = vld [vmem:[%s178 + $0x5b0] sm:$0xff]
        %v902 = vld [vmem:[%s178 + $0x5b8] sm:$0xff]
        %v903 = vld [vmem:[%s178 + $0x5c0] sm:$0xff]
        %v904 = vld [vmem:[%s178 + $0x5c8] sm:$0xff]
        %v905 = vld [vmem:[%s178 + $0x5d0] sm:$0xff]
        %v906 = vld [vmem:[%s178 + $0x5d8] sm:$0xff]
        %v907 = vld [vmem:[%s178 + $0x5e0] sm:$0xff]
        %v908 = vld [vmem:[%s178 + $0x5e8] sm:$0xff]
        %v909 = vld [vmem:[%s178 + $0x5f0] sm:$0xff]
        %v910 = vld [vmem:[%s178 + $0x5f8] sm:$0xff]
        %v911 = vld [vmem:[%s178 + $0x600] sm:$0xff]
        %v912 = vld [vmem:[%s178 + $0x608] sm:$0xff]
        %v913 = vld [vmem:[%s178 + $0x610] sm:$0xff]
        %v914 = vld [vmem:[%s178 + $0x618] sm:$0xff]
        %v915 = vld [vmem:[%s178 + $0x620] sm:$0xff]
        %v916 = vld [vmem:[%s178 + $0x628] sm:$0xff]
        %v917 = vld [vmem:[%s178 + $0x630] sm:$0xff]
        %v918 = vld [vmem:[%s178 + $0x638] sm:$0xff]
        %v919 = vld [vmem:[%s178 + $0x640] sm:$0xff]
        %v920 = vld [vmem:[%s178 + $0x648] sm:$0xff]
        %v921 = vld [vmem:[%s178 + $0x650] sm:$0xff]
        %v922 = vld [vmem:[%s178 + $0x658] sm:$0xff]
        %v923 = vld [vmem:[%s178 + $0x660] sm:$0xff]
        %v924 = vld [vmem:[%s178 + $0x668] sm:$0xff]
        %v925 = vld [vmem:[%s178 + $0x670] sm:$0xff]
        %v926 = vld [vmem:[%s178 + $0x678] sm:$0xff]
        %v927 = vld [vmem:[%s178 + $0x680] sm:$0xff]
        %v928 = vld [vmem:[%s178 + $0x688] sm:$0xff]
        %v929 = vld [vmem:[%s178 + $0x690] sm:$0xff]
        %v930 = vld [vmem:[%s178 + $0x698] sm:$0xff]
        %v931 = vld [vmem:[%s178 + $0x6a0] sm:$0xff]
        %v932 = vld [vmem:[%s178 + $0x6a8] sm:$0xff]
        %v933 = vld [vmem:[%s178 + $0x6b0] sm:$0xff]
        %v934 = vld [vmem:[%s178 + $0x6b8] sm:$0xff]
        %v935 = vld [vmem:[%s178 + $0x6c0] sm:$0xff]
        %v936 = vld [vmem:[%s178 + $0x6c8] sm:$0xff]
        %v937 = vld [vmem:[%s178 + $0x6d0] sm:$0xff]
        %v938 = vld [vmem:[%s178 + $0x6d8] sm:$0xff]
        %v939 = vld [vmem:[%s178 + $0x6e0] sm:$0xff]
        %v940 = vld [vmem:[%s178 + $0x6e8] sm:$0xff]
        %v941 = vld [vmem:[%s178 + $0x6f0] sm:$0xff]
        %v942 = vld [vmem:[%s178 + $0x6f8] sm:$0xff]
        %v943 = vld [vmem:[%s178 + $0x700] sm:$0xff]
        %v944 = vld [vmem:[%s178 + $0x708] sm:$0xff]
        %v945 = vld [vmem:[%s178 + $0x710] sm:$0xff]
        %v946 = vld [vmem:[%s178 + $0x718] sm:$0xff]
        %v947 = vld [vmem:[%s178 + $0x720] sm:$0xff]
        %v948 = vld [vmem:[%s178 + $0x728] sm:$0xff]
        %v949 = vld [vmem:[%s178 + $0x730] sm:$0xff]
        %v950 = vld [vmem:[%s178 + $0x738] sm:$0xff]
        %v951 = vld [vmem:[%s178 + $0x740] sm:$0xff]
        %v952 = vld [vmem:[%s178 + $0x748] sm:$0xff]
        %v953 = vld [vmem:[%s178 + $0x750] sm:$0xff]
        %v954 = vld [vmem:[%s178 + $0x758] sm:$0xff]
        %v955 = vld [vmem:[%s178 + $0x760] sm:$0xff]
        %v956 = vld [vmem:[%s178 + $0x768] sm:$0xff]
        %v957 = vld [vmem:[%s178 + $0x770] sm:$0xff]
        %v958 = vld [vmem:[%s178 + $0x778] sm:$0xff]
        %v959 = vld [vmem:[%s178 + $0x780] sm:$0xff]
        %v960 = vld [vmem:[%s178 + $0x788] sm:$0xff]
        %v961 = vld [vmem:[%s178 + $0x790] sm:$0xff]
        %v962 = vld [vmem:[%s178 + $0x798] sm:$0xff]
        %v963 = vld [vmem:[%s178 + $0x7a0] sm:$0xff]
        %v964 = vld [vmem:[%s178 + $0x7a8] sm:$0xff]
        %v965 = vld [vmem:[%s178 + $0x7b0] sm:$0xff]
        %v966 = vld [vmem:[%s178 + $0x7b8] sm:$0xff]
        %v967 = vld [vmem:[%s178 + $0x7c0] sm:$0xff]
        %v968 = vld [vmem:[%s178 + $0x7c8] sm:$0xff]
        %v969 = vld [vmem:[%s178 + $0x7d0] sm:$0xff]
        %v970 = vld [vmem:[%s178 + $0x7d8] sm:$0xff]
        %v971 = vld [vmem:[%s178 + $0x7e0] sm:$0xff]
        %v972 = vld [vmem:[%s178 + $0x7e8] sm:$0xff]
        %v973 = vld [vmem:[%s178 + $0x7f0] sm:$0xff]
        %v974 = vld [vmem:[%s178 + $0x7f8] sm:$0xff]
        %v975 = vld [vmem:[%s178 + $0x800] sm:$0xff]
        %v976 = vld [vmem:[%s178 + $0x808] sm:$0xff]
        %v977 = vld [vmem:[%s178 + $0x810] sm:$0xff]
        %v978 = vld [vmem:[%s178 + $0x818] sm:$0xff]
        %v979 = vld [vmem:[%s178 + $0x820] sm:$0xff]
        %v980 = vld [vmem:[%s178 + $0x828] sm:$0xff]
        %v981 = vld [vmem:[%s178 + $0x830] sm:$0xff]
        %v982 = vld [vmem:[%s178 + $0x838] sm:$0xff]
        %v983 = vld [vmem:[%s178 + $0x840] sm:$0xff]
        %v984 = vld [vmem:[%s178 + $0x848] sm:$0xff]
        %v985 = vld [vmem:[%s178 + $0x850] sm:$0xff]
        %v986 = vld [vmem:[%s178 + $0x858] sm:$0xff]
        %v987 = vld [vmem:[%s178 + $0x860] sm:$0xff]
        %v988 = vld [vmem:[%s178 + $0x868] sm:$0xff]
        %v989 = vld [vmem:[%s178 + $0x870] sm:$0xff]
        %v990 = vld [vmem:[%s178 + $0x878] sm:$0xff]
        %v991 = vld [vmem:[%s178 + $0x880] sm:$0xff]
        %v992 = vld [vmem:[%s178 + $0x888] sm:$0xff]
        %v993 = vld [vmem:[%s178 + $0x890] sm:$0xff]
        %v994 = vld [vmem:[%s178 + $0x898] sm:$0xff]
        %v995 = vld [vmem:[%s178 + $0x8a0] sm:$0xff]
        %v996 = vld [vmem:[%s178 + $0x8a8] sm:$0xff]
        %v997 = vld [vmem:[%s178 + $0x8b0] sm:$0xff]
        %v998 = vld [vmem:[%s178 + $0x8b8] sm:$0xff]
        %v999 = vld [vmem:[%s178 + $0x8c0] sm:$0xff]
        %v1000 = vld [vmem:[%s178 + $0x8c8] sm:$0xff]
        %v1001 = vld [vmem:[%s178 + $0x8d0] sm:$0xff]
        %v1002 = vld [vmem:[%s178 + $0x8d8] sm:$0xff]
        %v1003 = vld [vmem:[%s178 + $0x8e0] sm:$0xff]
        %v1004 = vld [vmem:[%s178 + $0x8e8] sm:$0xff]
        %v1005 = vld [vmem:[%s178 + $0x8f0] sm:$0xff]
        %v1006 = vld [vmem:[%s178 + $0x8f8] sm:$0xff]
        %v1007 = vld [vmem:[%s178 + $0x900] sm:$0xff]
        %v1008 = vld [vmem:[%s178 + $0x908] sm:$0xff]
        %v1009 = vld [vmem:[%s178 + $0x910] sm:$0xff]
        %v1010 = vld [vmem:[%s178 + $0x918] sm:$0xff]
        %v1011 = vld [vmem:[%s178 + $0x920] sm:$0xff]
        %v1012 = vld [vmem:[%s178 + $0x928] sm:$0xff]
        %v1013 = vld [vmem:[%s178 + $0x930] sm:$0xff]
        %v1014 = vld [vmem:[%s178 + $0x938] sm:$0xff]
        %v1015 = vld [vmem:[%s178 + $0x940] sm:$0xff]
        %v1016 = vld [vmem:[%s178 + $0x948] sm:$0xff]
        %v1017 = vld [vmem:[%s178 + $0x950] sm:$0xff]
        %v1018 = vld [vmem:[%s178 + $0x958] sm:$0xff]
        %v1019 = vld [vmem:[%s178 + $0x960] sm:$0xff]
        %v1020 = vld [vmem:[%s178 + $0x968] sm:$0xff]
        %v1021 = vld [vmem:[%s178 + $0x970] sm:$0xff]
        %v1022 = vld [vmem:[%s178 + $0x978] sm:$0xff]
        %v1023 = vld [vmem:[%s178 + $0x980] sm:$0xff]
        %v1024 = vld [vmem:[%s178 + $0x988] sm:$0xff]
        %v1025 = vld [vmem:[%s178 + $0x990] sm:$0xff]
        %v1026 = vld [vmem:[%s178 + $0x998] sm:$0xff]
        %v1027 = vld [vmem:[%s178 + $0x9a0] sm:$0xff]
        %v1028 = vld [vmem:[%s178 + $0x9a8] sm:$0xff]
        %v1029 = vld [vmem:[%s178 + $0x9b0] sm:$0xff]
        %v1030 = vld [vmem:[%s178 + $0x9b8] sm:$0xff]
        %v1031 = vld [vmem:[%s178 + $0x9c0] sm:$0xff]
        %v1032 = vld [vmem:[%s178 + $0x9c8] sm:$0xff]
        %v1033 = vld [vmem:[%s178 + $0x9d0] sm:$0xff]
        %v1034 = vld [vmem:[%s178 + $0x9d8] sm:$0xff]
        %v1035 = vld [vmem:[%s178 + $0x9e0] sm:$0xff]
        %v1036 = vld [vmem:[%s178 + $0x9e8] sm:$0xff]
        %v1037 = vld [vmem:[%s178 + $0x9f0] sm:$0xff]
        %v1038 = vld [vmem:[%s178 + $0x9f8] sm:$0xff]
        %v1039 = vld [vmem:[%s178 + $0xa00] sm:$0xff]
        %v1040 = vld [vmem:[%s178 + $0xa08] sm:$0xff]
        %v1041 = vld [vmem:[%s178 + $0xa10] sm:$0xff]
        %v1042 = vld [vmem:[%s178 + $0xa18] sm:$0xff]
        %v1043 = vld [vmem:[%s178 + $0xa20] sm:$0xff]
        %v1044 = vld [vmem:[%s178 + $0xa28] sm:$0xff]
        %v1045 = vld [vmem:[%s178 + $0xa30] sm:$0xff]
        %v1046 = vld [vmem:[%s178 + $0xa38] sm:$0xff]
        %v1047 = vld [vmem:[%s178 + $0xa40] sm:$0xff]
        %v1048 = vld [vmem:[%s178 + $0xa48] sm:$0xff]
        %v1049 = vld [vmem:[%s178 + $0xa50] sm:$0xff]
        %v1050 = vld [vmem:[%s178 + $0xa58] sm:$0xff]
        %v1051 = vld [vmem:[%s178 + $0xa60] sm:$0xff]
        %v1052 = vld [vmem:[%s178 + $0xa68] sm:$0xff]
        %v1053 = vld [vmem:[%s178 + $0xa70] sm:$0xff]
        %v1054 = vld [vmem:[%s178 + $0xa78] sm:$0xff]
        %v1055 = vld [vmem:[%s178 + $0xa80] sm:$0xff]
        %v1056 = vld [vmem:[%s178 + $0xa88] sm:$0xff]
        %v1057 = vld [vmem:[%s178 + $0xa90] sm:$0xff]
        %v1058 = vld [vmem:[%s178 + $0xa98] sm:$0xff]
        %v1059 = vld [vmem:[%s178 + $0xaa0] sm:$0xff]
        %v1060 = vld [vmem:[%s178 + $0xaa8] sm:$0xff]
        %v1061 = vld [vmem:[%s178 + $0xab0] sm:$0xff]
        %v1062 = vld [vmem:[%s178 + $0xab8] sm:$0xff]
        %v1063 = vld [vmem:[%s178 + $0xac0] sm:$0xff]
        %v1064 = vld [vmem:[%s178 + $0xac8] sm:$0xff]
        %v1065 = vld [vmem:[%s178 + $0xad0] sm:$0xff]
        %v1066 = vld [vmem:[%s178 + $0xad8] sm:$0xff]
        %v1067 = vld [vmem:[%s178 + $0xae0] sm:$0xff]
        %v1068 = vld [vmem:[%s178 + $0xae8] sm:$0xff]
        %v1069 = vld [vmem:[%s178 + $0xaf0] sm:$0xff]
        %v1070 = vld [vmem:[%s178 + $0xaf8] sm:$0xff]
        %v1071 = vld [vmem:[%s178 + $0xb00] sm:$0xff]
        %v1072 = vld [vmem:[%s178 + $0xb08] sm:$0xff]
        %v1073 = vld [vmem:[%s178 + $0xb10] sm:$0xff]
        %v1074 = vld [vmem:[%s178 + $0xb18] sm:$0xff]
        %v1075 = vld [vmem:[%s178 + $0xb20] sm:$0xff]
        %v1076 = vld [vmem:[%s178 + $0xb28] sm:$0xff]
        %v1077 = vld [vmem:[%s178 + $0xb30] sm:$0xff]
        %v1078 = vld [vmem:[%s178 + $0xb38] sm:$0xff]
        %v1079 = vld [vmem:[%s178 + $0xb40] sm:$0xff]
        %v1080 = vld [vmem:[%s178 + $0xb48] sm:$0xff]
        %v1081 = vld [vmem:[%s178 + $0xb50] sm:$0xff]
        %v1082 = vld [vmem:[%s178 + $0xb58] sm:$0xff]
        %v1083 = vld [vmem:[%s178 + $0xb60] sm:$0xff]
        %v1084 = vld [vmem:[%s178 + $0xb68] sm:$0xff]
        %v1085 = vld [vmem:[%s178 + $0xb70] sm:$0xff]
        %v1086 = vld [vmem:[%s178 + $0xb78] sm:$0xff]
        %v1087 = vld [vmem:[%s178 + $0xb80] sm:$0xff]
        %v1088 = vld [vmem:[%s178 + $0xb88] sm:$0xff]
        %v1089 = vld [vmem:[%s178 + $0xb90] sm:$0xff]
        %v1090 = vld [vmem:[%s178 + $0xb98] sm:$0xff]
        %v1091 = vld [vmem:[%s178 + $0xba0] sm:$0xff]
        %v1092 = vld [vmem:[%s178 + $0xba8] sm:$0xff]
        %v1093 = vld [vmem:[%s178 + $0xbb0] sm:$0xff]
        %v1094 = vld [vmem:[%s178 + $0xbb8] sm:$0xff]
        %v1095 = vld [vmem:[%s178 + $0xbc0] sm:$0xff]
        %v1096 = vld [vmem:[%s178 + $0xbc8] sm:$0xff]
        %v1097 = vld [vmem:[%s178 + $0xbd0] sm:$0xff]
        %v1098 = vld [vmem:[%s178 + $0xbd8] sm:$0xff]
        %v1099 = vld [vmem:[%s178 + $0xbe0] sm:$0xff]
        %v1100 = vld [vmem:[%s178 + $0xbe8] sm:$0xff]
        %v1101 = vld [vmem:[%s178 + $0xbf0] sm:$0xff]
        %v1102 = vld [vmem:[%s178 + $0xbf8] sm:$0xff]
        %v1103 = vld [vmem:[%s178 + $0xc00] sm:$0xff]
        %v1104 = vld [vmem:[%s178 + $0xc08] sm:$0xff]
        %v1105 = vld [vmem:[%s178 + $0xc10] sm:$0xff]
        %v1106 = vld [vmem:[%s178 + $0xc18] sm:$0xff]
        %v1107 = vld [vmem:[%s178 + $0xc20] sm:$0xff]
        %v1108 = vld [vmem:[%s178 + $0xc28] sm:$0xff]
        %v1109 = vld [vmem:[%s178 + $0xc30] sm:$0xff]
        %v1110 = vld [vmem:[%s178 + $0xc38] sm:$0xff]
        %v1111 = vld [vmem:[%s178 + $0xc40] sm:$0xff]
        %v1112 = vld [vmem:[%s178 + $0xc48] sm:$0xff]
        %v1113 = vld [vmem:[%s178 + $0xc50] sm:$0xff]
        %v1114 = vld [vmem:[%s178 + $0xc58] sm:$0xff]
        %v1115 = vld [vmem:[%s178 + $0xc60] sm:$0xff]
        %v1116 = vld [vmem:[%s178 + $0xc68] sm:$0xff]
        %v1117 = vld [vmem:[%s178 + $0xc70] sm:$0xff]
        %v1118 = vld [vmem:[%s178 + $0xc78] sm:$0xff]
        %v1119 = vld [vmem:[%s178 + $0xc80] sm:$0xff]
        %v1120 = vld [vmem:[%s178 + $0xc88] sm:$0xff]
        %v1121 = vld [vmem:[%s178 + $0xc90] sm:$0xff]
        %v1122 = vld [vmem:[%s178 + $0xc98] sm:$0xff]
        %v1123 = vld [vmem:[%s178 + $0xca0] sm:$0xff]
        %v1124 = vld [vmem:[%s178 + $0xca8] sm:$0xff]
        %v1125 = vld [vmem:[%s178 + $0xcb0] sm:$0xff]
        %v1126 = vld [vmem:[%s178 + $0xcb8] sm:$0xff]
        %v1127 = vld [vmem:[%s178 + $0xcc0] sm:$0xff]
        %v1128 = vld [vmem:[%s178 + $0xcc8] sm:$0xff]
        %v1129 = vld [vmem:[%s178 + $0xcd0] sm:$0xff]
        %v1130 = vld [vmem:[%s178 + $0xcd8] sm:$0xff]
        %v1131 = vld [vmem:[%s178 + $0xce0] sm:$0xff]
        %v1132 = vld [vmem:[%s178 + $0xce8] sm:$0xff]
        %v1133 = vld [vmem:[%s178 + $0xcf0] sm:$0xff]
        %v1134 = vld [vmem:[%s178 + $0xcf8] sm:$0xff]
        %v1135 = vld [vmem:[%s178 + $0xd00] sm:$0xff]
        %v1136 = vld [vmem:[%s178 + $0xd08] sm:$0xff]
        %v1137 = vld [vmem:[%s178 + $0xd10] sm:$0xff]
        %v1138 = vld [vmem:[%s178 + $0xd18] sm:$0xff]
        %v1139 = vld [vmem:[%s178 + $0xd20] sm:$0xff]
        %v1140 = vld [vmem:[%s178 + $0xd28] sm:$0xff]
        %v1141 = vld [vmem:[%s178 + $0xd30] sm:$0xff]
        %v1142 = vld [vmem:[%s178 + $0xd38] sm:$0xff]
        %v1143 = vld [vmem:[%s178 + $0xd40] sm:$0xff]
        %v1144 = vld [vmem:[%s178 + $0xd48] sm:$0xff]
        %v1145 = vld [vmem:[%s178 + $0xd50] sm:$0xff]
        %v1146 = vld [vmem:[%s178 + $0xd58] sm:$0xff]
        %v1147 = vld [vmem:[%s178 + $0xd60] sm:$0xff]
        %v1148 = vld [vmem:[%s178 + $0xd68] sm:$0xff]
        %v1149 = vld [vmem:[%s178 + $0xd70] sm:$0xff]
        %v1150 = vld [vmem:[%s178 + $0xd78] sm:$0xff]
        %v1151 = vld [vmem:[%s178 + $0xd80] sm:$0xff]
        %v1152 = vld [vmem:[%s178 + $0xd88] sm:$0xff]
        %v1153 = vld [vmem:[%s178 + $0xd90] sm:$0xff]
        %v1154 = vld [vmem:[%s178 + $0xd98] sm:$0xff]
        %v1155 = vld [vmem:[%s178 + $0xda0] sm:$0xff]
        %v1156 = vld [vmem:[%s178 + $0xda8] sm:$0xff]
        %v1157 = vld [vmem:[%s178 + $0xdb0] sm:$0xff]
        %v1158 = vld [vmem:[%s178 + $0xdb8] sm:$0xff]
        %v1159 = vld [vmem:[%s178 + $0xdc0] sm:$0xff]
        %v1160 = vld [vmem:[%s178 + $0xdc8] sm:$0xff]
        %v1161 = vld [vmem:[%s178 + $0xdd0] sm:$0xff]
        %v1162 = vld [vmem:[%s178 + $0xdd8] sm:$0xff]
        %v1163 = vld [vmem:[%s178 + $0xde0] sm:$0xff]
        %v1164 = vld [vmem:[%s178 + $0xde8] sm:$0xff]
        %v1165 = vld [vmem:[%s178 + $0xdf0] sm:$0xff]
        %v1166 = vld [vmem:[%s178 + $0xdf8] sm:$0xff]
        %v1167 = vld [vmem:[%s178 + $0xe00] sm:$0xff]
        %v1168 = vld [vmem:[%s178 + $0xe08] sm:$0xff]
        %v1169 = vld [vmem:[%s178 + $0xe10] sm:$0xff]
        %v1170 = vld [vmem:[%s178 + $0xe18] sm:$0xff]
        %v1171 = vld [vmem:[%s178 + $0xe20] sm:$0xff]
        %v1172 = vld [vmem:[%s178 + $0xe28] sm:$0xff]
        %v1173 = vld [vmem:[%s178 + $0xe30] sm:$0xff]
        %v1174 = vld [vmem:[%s178 + $0xe38] sm:$0xff]
        %v1175 = vld [vmem:[%s178 + $0xe40] sm:$0xff]
        %v1176 = vld [vmem:[%s178 + $0xe48] sm:$0xff]
        %v1177 = vld [vmem:[%s178 + $0xe50] sm:$0xff]
        %v1178 = vld [vmem:[%s178 + $0xe58] sm:$0xff]
        %v1179 = vld [vmem:[%s178 + $0xe60] sm:$0xff]
        %v1180 = vld [vmem:[%s178 + $0xe68] sm:$0xff]
        %v1181 = vld [vmem:[%s178 + $0xe70] sm:$0xff]
        %v1182 = vld [vmem:[%s178 + $0xe78] sm:$0xff]
        %v1183 = vld [vmem:[%s178 + $0xe80] sm:$0xff]
        %v1184 = vld [vmem:[%s178 + $0xe88] sm:$0xff]
        %v1185 = vld [vmem:[%s178 + $0xe90] sm:$0xff]
        %v1186 = vld [vmem:[%s178 + $0xe98] sm:$0xff]
        %v1187 = vld [vmem:[%s178 + $0xea0] sm:$0xff]
        %v1188 = vld [vmem:[%s178 + $0xea8] sm:$0xff]
        %v1189 = vld [vmem:[%s178 + $0xeb0] sm:$0xff]
        %v1190 = vld [vmem:[%s178 + $0xeb8] sm:$0xff]
        %v1191 = vld [vmem:[%s178 + $0xec0] sm:$0xff]
        %v1192 = vld [vmem:[%s178 + $0xec8] sm:$0xff]
        %v1193 = vld [vmem:[%s178 + $0xed0] sm:$0xff]
        %v1194 = vld [vmem:[%s178 + $0xed8] sm:$0xff]
        %v1195 = vld [vmem:[%s178 + $0xee0] sm:$0xff]
        %v1196 = vld [vmem:[%s178 + $0xee8] sm:$0xff]
        %v1197 = vld [vmem:[%s178 + $0xef0] sm:$0xff]
        %v1198 = vld [vmem:[%s178 + $0xef8] sm:$0xff]
        %v1199 = vld [vmem:[%s178 + $0xf00] sm:$0xff]
        %v1200 = vld [vmem:[%s178 + $0xf08] sm:$0xff]
        %v1201 = vld [vmem:[%s178 + $0xf10] sm:$0xff]
        %v1202 = vld [vmem:[%s178 + $0xf18] sm:$0xff]
        %v1203 = vld [vmem:[%s178 + $0xf20] sm:$0xff]
        %v1204 = vld [vmem:[%s178 + $0xf28] sm:$0xff]
        %v1205 = vld [vmem:[%s178 + $0xf30] sm:$0xff]
        %v1206 = vld [vmem:[%s178 + $0xf38] sm:$0xff]
        %v1207 = vld [vmem:[%s178 + $0xf40] sm:$0xff]
        %v1208 = vld [vmem:[%s178 + $0xf48] sm:$0xff]
        %v1209 = vld [vmem:[%s178 + $0xf50] sm:$0xff]
        %v1210 = vld [vmem:[%s178 + $0xf58] sm:$0xff]
        %v1211 = vld [vmem:[%s178 + $0xf60] sm:$0xff]
        %v1212 = vld [vmem:[%s178 + $0xf68] sm:$0xff]
        %v1213 = vld [vmem:[%s178 + $0xf70] sm:$0xff]
        %v1214 = vld [vmem:[%s178 + $0xf78] sm:$0xff]
        %v1215 = vld [vmem:[%s178 + $0xf80] sm:$0xff]
        %v1216 = vld [vmem:[%s178 + $0xf88] sm:$0xff]
        %v1217 = vld [vmem:[%s178 + $0xf90] sm:$0xff]
        %v1218 = vld [vmem:[%s178 + $0xf98] sm:$0xff]
        %v1219 = vld [vmem:[%s178 + $0xfa0] sm:$0xff]
        %v1220 = vld [vmem:[%s178 + $0xfa8] sm:$0xff]
        %v1221 = vld [vmem:[%s178 + $0xfb0] sm:$0xff]
        %v1222 = vld [vmem:[%s178 + $0xfb8] sm:$0xff]
        %v1223 = vld [vmem:[%s178 + $0xfc0] sm:$0xff]
        %v1224 = vld [vmem:[%s178 + $0xfc8] sm:$0xff]
        %v1225 = vld [vmem:[%s178 + $0xfd0] sm:$0xff]
        %v1226 = vld [vmem:[%s178 + $0xfd8] sm:$0xff]
        %v1227 = vld [vmem:[%s178 + $0xfe0] sm:$0xff]
        %v1228 = vld [vmem:[%s178 + $0xfe8] sm:$0xff]
        %v1229 = vld [vmem:[%s178 + $0xff0] sm:$0xff]
        %v1230 = vld [vmem:[%s178 + $0xff8] sm:$0xff]
        %v1231 = vmul.f32 %v207, %v719
        %v1232 = vmul.f32 %v208, %v720
        %v1233 = vmul.f32 %v209, %v721
        %v1234 = vmul.f32 %v210, %v722
        %v1235 = vmul.f32 %v211, %v723
        %v1236 = vmul.f32 %v212, %v724
        %v1237 = vmul.f32 %v213, %v725
        %v1238 = vmul.f32 %v214, %v726
        %v1239 = vmul.f32 %v215, %v727
        %v1240 = vmul.f32 %v216, %v728
        %v1241 = vmul.f32 %v217, %v729
        %v1242 = vmul.f32 %v218, %v730
        %v1243 = vmul.f32 %v219, %v731
        %v1244 = vmul.f32 %v220, %v732
        %v1245 = vmul.f32 %v221, %v733
        %v1246 = vmul.f32 %v222, %v734
        %v1247 = vmul.f32 %v223, %v735
        %v1248 = vmul.f32 %v224, %v736
        %v1249 = vmul.f32 %v225, %v737
        %v1250 = vmul.f32 %v226, %v738
        %v1251 = vmul.f32 %v227, %v739
        %v1252 = vmul.f32 %v228, %v740
        %v1253 = vmul.f32 %v229, %v741
        %v1254 = vmul.f32 %v230, %v742
        %v1255 = vmul.f32 %v231, %v743
        %v1256 = vmul.f32 %v232, %v744
        %v1257 = vmul.f32 %v233, %v745
        %v1258 = vmul.f32 %v234, %v746
        %v1259 = vmul.f32 %v235, %v747
        %v1260 = vmul.f32 %v236, %v748
        %v1261 = vmul.f32 %v237, %v749
        %v1262 = vmul.f32 %v238, %v750
        %v1263 = vmul.f32 %v239, %v751
        %v1264 = vmul.f32 %v240, %v752
        %v1265 = vmul.f32 %v241, %v753
        %v1266 = vmul.f32 %v242, %v754
        %v1267 = vmul.f32 %v243, %v755
        %v1268 = vmul.f32 %v244, %v756
        %v1269 = vmul.f32 %v245, %v757
        %v1270 = vmul.f32 %v246, %v758
        %v1271 = vmul.f32 %v247, %v759
        %v1272 = vmul.f32 %v248, %v760
        %v1273 = vmul.f32 %v249, %v761
        %v1274 = vmul.f32 %v250, %v762
        %v1275 = vmul.f32 %v251, %v763
        %v1276 = vmul.f32 %v252, %v764
        %v1277 = vmul.f32 %v253, %v765
        %v1278 = vmul.f32 %v254, %v766
        %v1279 = vmul.f32 %v255, %v767
        %v1280 = vmul.f32 %v256, %v768
        %v1281 = vmul.f32 %v257, %v769
        %v1282 = vmul.f32 %v258, %v770
        %v1283 = vmul.f32 %v259, %v771
        %v1284 = vmul.f32 %v260, %v772
        %v1285 = vmul.f32 %v261, %v773
        %v1286 = vmul.f32 %v262, %v774
        %v1287 = vmul.f32 %v263, %v775
        %v1288 = vmul.f32 %v264, %v776
        %v1289 = vmul.f32 %v265, %v777
        %v1290 = vmul.f32 %v266, %v778
        %v1291 = vmul.f32 %v267, %v779
        %v1292 = vmul.f32 %v268, %v780
        %v1293 = vmul.f32 %v269, %v781
        %v1294 = vmul.f32 %v270, %v782
        %v1295 = vmul.f32 %v271, %v783
        %v1296 = vmul.f32 %v272, %v784
        %v1297 = vmul.f32 %v273, %v785
        %v1298 = vmul.f32 %v274, %v786
        %v1299 = vmul.f32 %v275, %v787
        %v1300 = vmul.f32 %v276, %v788
        %v1301 = vmul.f32 %v277, %v789
        %v1302 = vmul.f32 %v278, %v790
        %v1303 = vmul.f32 %v279, %v791
        %v1304 = vmul.f32 %v280, %v792
        %v1305 = vmul.f32 %v281, %v793
        %v1306 = vmul.f32 %v282, %v794
        %v1307 = vmul.f32 %v283, %v795
        %v1308 = vmul.f32 %v284, %v796
        %v1309 = vmul.f32 %v285, %v797
        %v1310 = vmul.f32 %v286, %v798
        %v1311 = vmul.f32 %v287, %v799
        %v1312 = vmul.f32 %v288, %v800
        %v1313 = vmul.f32 %v289, %v801
        %v1314 = vmul.f32 %v290, %v802
        %v1315 = vmul.f32 %v291, %v803
        %v1316 = vmul.f32 %v292, %v804
        %v1317 = vmul.f32 %v293, %v805
        %v1318 = vmul.f32 %v294, %v806
        %v1319 = vmul.f32 %v295, %v807
        %v1320 = vmul.f32 %v296, %v808
        %v1321 = vmul.f32 %v297, %v809
        %v1322 = vmul.f32 %v298, %v810
        %v1323 = vmul.f32 %v299, %v811
        %v1324 = vmul.f32 %v300, %v812
        %v1325 = vmul.f32 %v301, %v813
        %v1326 = vmul.f32 %v302, %v814
        %v1327 = vmul.f32 %v303, %v815
        %v1328 = vmul.f32 %v304, %v816
        %v1329 = vmul.f32 %v305, %v817
        %v1330 = vmul.f32 %v306, %v818
        %v1331 = vmul.f32 %v307, %v819
        %v1332 = vmul.f32 %v308, %v820
        %v1333 = vmul.f32 %v309, %v821
        %v1334 = vmul.f32 %v310, %v822
        %v1335 = vmul.f32 %v311, %v823
        %v1336 = vmul.f32 %v312, %v824
        %v1337 = vmul.f32 %v313, %v825
        %v1338 = vmul.f32 %v314, %v826
        %v1339 = vmul.f32 %v315, %v827
        %v1340 = vmul.f32 %v316, %v828
        %v1341 = vmul.f32 %v317, %v829
        %v1342 = vmul.f32 %v318, %v830
        %v1343 = vmul.f32 %v319, %v831
        %v1344 = vmul.f32 %v320, %v832
        %v1345 = vmul.f32 %v321, %v833
        %v1346 = vmul.f32 %v322, %v834
        %v1347 = vmul.f32 %v323, %v835
        %v1348 = vmul.f32 %v324, %v836
        %v1349 = vmul.f32 %v325, %v837
        %v1350 = vmul.f32 %v326, %v838
        %v1351 = vmul.f32 %v327, %v839
        %v1352 = vmul.f32 %v328, %v840
        %v1353 = vmul.f32 %v329, %v841
        %v1354 = vmul.f32 %v330, %v842
        %v1355 = vmul.f32 %v331, %v843
        %v1356 = vmul.f32 %v332, %v844
        %v1357 = vmul.f32 %v333, %v845
        %v1358 = vmul.f32 %v334, %v846
        %v1359 = vmul.f32 %v335, %v847
        %v1360 = vmul.f32 %v336, %v848
        %v1361 = vmul.f32 %v337, %v849
        %v1362 = vmul.f32 %v338, %v850
        %v1363 = vmul.f32 %v339, %v851
        %v1364 = vmul.f32 %v340, %v852
        %v1365 = vmul.f32 %v341, %v853
        %v1366 = vmul.f32 %v342, %v854
        %v1367 = vmul.f32 %v343, %v855
        %v1368 = vmul.f32 %v344, %v856
        %v1369 = vmul.f32 %v345, %v857
        %v1370 = vmul.f32 %v346, %v858
        %v1371 = vmul.f32 %v347, %v859
        %v1372 = vmul.f32 %v348, %v860
        %v1373 = vmul.f32 %v349, %v861
        %v1374 = vmul.f32 %v350, %v862
        %v1375 = vmul.f32 %v351, %v863
        %v1376 = vmul.f32 %v352, %v864
        %v1377 = vmul.f32 %v353, %v865
        %v1378 = vmul.f32 %v354, %v866
        %v1379 = vmul.f32 %v355, %v867
        %v1380 = vmul.f32 %v356, %v868
        %v1381 = vmul.f32 %v357, %v869
        %v1382 = vmul.f32 %v358, %v870
        %v1383 = vmul.f32 %v359, %v871
        %v1384 = vmul.f32 %v360, %v872
        %v1385 = vmul.f32 %v361, %v873
        %v1386 = vmul.f32 %v362, %v874
        %v1387 = vmul.f32 %v363, %v875
        %v1388 = vmul.f32 %v364, %v876
        %v1389 = vmul.f32 %v365, %v877
        %v1390 = vmul.f32 %v366, %v878
        %v1391 = vmul.f32 %v367, %v879
        %v1392 = vmul.f32 %v368, %v880
        %v1393 = vmul.f32 %v369, %v881
        %v1394 = vmul.f32 %v370, %v882
        %v1395 = vmul.f32 %v371, %v883
        %v1396 = vmul.f32 %v372, %v884
        %v1397 = vmul.f32 %v373, %v885
        %v1398 = vmul.f32 %v374, %v886
        %v1399 = vmul.f32 %v375, %v887
        %v1400 = vmul.f32 %v376, %v888
        %v1401 = vmul.f32 %v377, %v889
        %v1402 = vmul.f32 %v378, %v890
        %v1403 = vmul.f32 %v379, %v891
        %v1404 = vmul.f32 %v380, %v892
        %v1405 = vmul.f32 %v381, %v893
        %v1406 = vmul.f32 %v382, %v894
        %v1407 = vmul.f32 %v383, %v895
        %v1408 = vmul.f32 %v384, %v896
        %v1409 = vmul.f32 %v385, %v897
        %v1410 = vmul.f32 %v386, %v898
        %v1411 = vmul.f32 %v387, %v899
        %v1412 = vmul.f32 %v388, %v900
        %v1413 = vmul.f32 %v389, %v901
        %v1414 = vmul.f32 %v390, %v902
        %v1415 = vmul.f32 %v391, %v903
        %v1416 = vmul.f32 %v392, %v904
        %v1417 = vmul.f32 %v393, %v905
        %v1418 = vmul.f32 %v394, %v906
        %v1419 = vmul.f32 %v395, %v907
        %v1420 = vmul.f32 %v396, %v908
        %v1421 = vmul.f32 %v397, %v909
        %v1422 = vmul.f32 %v398, %v910
        %v1423 = vmul.f32 %v399, %v911
        %v1424 = vmul.f32 %v400, %v912
        %v1425 = vmul.f32 %v401, %v913
        %v1426 = vmul.f32 %v402, %v914
        %v1427 = vmul.f32 %v403, %v915
        %v1428 = vmul.f32 %v404, %v916
        %v1429 = vmul.f32 %v405, %v917
        %v1430 = vmul.f32 %v406, %v918
        %v1431 = vmul.f32 %v407, %v919
        %v1432 = vmul.f32 %v408, %v920
        %v1433 = vmul.f32 %v409, %v921
        %v1434 = vmul.f32 %v410, %v922
        %v1435 = vmul.f32 %v411, %v923
        %v1436 = vmul.f32 %v412, %v924
        %v1437 = vmul.f32 %v413, %v925
        %v1438 = vmul.f32 %v414, %v926
        %v1439 = vmul.f32 %v415, %v927
        %v1440 = vmul.f32 %v416, %v928
        %v1441 = vmul.f32 %v417, %v929
        %v1442 = vmul.f32 %v418, %v930
        %v1443 = vmul.f32 %v419, %v931
        %v1444 = vmul.f32 %v420, %v932
        %v1445 = vmul.f32 %v421, %v933
        %v1446 = vmul.f32 %v422, %v934
        %v1447 = vmul.f32 %v423, %v935
        %v1448 = vmul.f32 %v424, %v936
        %v1449 = vmul.f32 %v425, %v937
        %v1450 = vmul.f32 %v426, %v938
        %v1451 = vmul.f32 %v427, %v939
        %v1452 = vmul.f32 %v428, %v940
        %v1453 = vmul.f32 %v429, %v941
        %v1454 = vmul.f32 %v430, %v942
        %v1455 = vmul.f32 %v431, %v943
        %v1456 = vmul.f32 %v432, %v944
        %v1457 = vmul.f32 %v433, %v945
        %v1458 = vmul.f32 %v434, %v946
        %v1459 = vmul.f32 %v435, %v947
        %v1460 = vmul.f32 %v436, %v948
        %v1461 = vmul.f32 %v437, %v949
        %v1462 = vmul.f32 %v438, %v950
        %v1463 = vmul.f32 %v439, %v951
        %v1464 = vmul.f32 %v440, %v952
        %v1465 = vmul.f32 %v441, %v953
        %v1466 = vmul.f32 %v442, %v954
        %v1467 = vmul.f32 %v443, %v955
        %v1468 = vmul.f32 %v444, %v956
        %v1469 = vmul.f32 %v445, %v957
        %v1470 = vmul.f32 %v446, %v958
        %v1471 = vmul.f32 %v447, %v959
        %v1472 = vmul.f32 %v448, %v960
        %v1473 = vmul.f32 %v449, %v961
        %v1474 = vmul.f32 %v450, %v962
        %v1475 = vmul.f32 %v451, %v963
        %v1476 = vmul.f32 %v452, %v964
        %v1477 = vmul.f32 %v453, %v965
        %v1478 = vmul.f32 %v454, %v966
        %v1479 = vmul.f32 %v455, %v967
        %v1480 = vmul.f32 %v456, %v968
        %v1481 = vmul.f32 %v457, %v969
        %v1482 = vmul.f32 %v458, %v970
        %v1483 = vmul.f32 %v459, %v971
        %v1484 = vmul.f32 %v460, %v972
        %v1485 = vmul.f32 %v461, %v973
        %v1486 = vmul.f32 %v462, %v974
        %v1487 = vmul.f32 %v463, %v975
        %v1488 = vmul.f32 %v464, %v976
        %v1489 = vmul.f32 %v465, %v977
        %v1490 = vmul.f32 %v466, %v978
        %v1491 = vmul.f32 %v467, %v979
        %v1492 = vmul.f32 %v468, %v980
        %v1493 = vmul.f32 %v469, %v981
        %v1494 = vmul.f32 %v470, %v982
        %v1495 = vmul.f32 %v471, %v983
        %v1496 = vmul.f32 %v472, %v984
        %v1497 = vmul.f32 %v473, %v985
        %v1498 = vmul.f32 %v474, %v986
        %v1499 = vmul.f32 %v475, %v987
        %v1500 = vmul.f32 %v476, %v988
        %v1501 = vmul.f32 %v477, %v989
        %v1502 = vmul.f32 %v478, %v990
        %v1503 = vmul.f32 %v479, %v991
        %v1504 = vmul.f32 %v480, %v992
        %v1505 = vmul.f32 %v481, %v993
        %v1506 = vmul.f32 %v482, %v994
        %v1507 = vmul.f32 %v483, %v995
        %v1508 = vmul.f32 %v484, %v996
        %v1509 = vmul.f32 %v485, %v997
        %v1510 = vmul.f32 %v486, %v998
        %v1511 = vmul.f32 %v487, %v999
        %v1512 = vmul.f32 %v488, %v1000
        %v1513 = vmul.f32 %v489, %v1001
        %v1514 = vmul.f32 %v490, %v1002
        %v1515 = vmul.f32 %v491, %v1003
        %v1516 = vmul.f32 %v492, %v1004
        %v1517 = vmul.f32 %v493, %v1005
        %v1518 = vmul.f32 %v494, %v1006
        %v1519 = vmul.f32 %v495, %v1007
        %v1520 = vmul.f32 %v496, %v1008
        %v1521 = vmul.f32 %v497, %v1009
        %v1522 = vmul.f32 %v498, %v1010
        %v1523 = vmul.f32 %v499, %v1011
        %v1524 = vmul.f32 %v500, %v1012
        %v1525 = vmul.f32 %v501, %v1013
        %v1526 = vmul.f32 %v502, %v1014
        %v1527 = vmul.f32 %v503, %v1015
        %v1528 = vmul.f32 %v504, %v1016
        %v1529 = vmul.f32 %v505, %v1017
        %v1530 = vmul.f32 %v506, %v1018
        %v1531 = vmul.f32 %v507, %v1019
        %v1532 = vmul.f32 %v508, %v1020
        %v1533 = vmul.f32 %v509, %v1021
        %v1534 = vmul.f32 %v510, %v1022
        %v1535 = vmul.f32 %v511, %v1023
        %v1536 = vmul.f32 %v512, %v1024
        %v1537 = vmul.f32 %v513, %v1025
        %v1538 = vmul.f32 %v514, %v1026
        %v1539 = vmul.f32 %v515, %v1027
        %v1540 = vmul.f32 %v516, %v1028
        %v1541 = vmul.f32 %v517, %v1029
        %v1542 = vmul.f32 %v518, %v1030
        %v1543 = vmul.f32 %v519, %v1031
        %v1544 = vmul.f32 %v520, %v1032
        %v1545 = vmul.f32 %v521, %v1033
        %v1546 = vmul.f32 %v522, %v1034
        %v1547 = vmul.f32 %v523, %v1035
        %v1548 = vmul.f32 %v524, %v1036
        %v1549 = vmul.f32 %v525, %v1037
        %v1550 = vmul.f32 %v526, %v1038
        %v1551 = vmul.f32 %v527, %v1039
        %v1552 = vmul.f32 %v528, %v1040
        %v1553 = vmul.f32 %v529, %v1041
        %v1554 = vmul.f32 %v530, %v1042
        %v1555 = vmul.f32 %v531, %v1043
        %v1556 = vmul.f32 %v532, %v1044
        %v1557 = vmul.f32 %v533, %v1045
        %v1558 = vmul.f32 %v534, %v1046
        %v1559 = vmul.f32 %v535, %v1047
        %v1560 = vmul.f32 %v536, %v1048
        %v1561 = vmul.f32 %v537, %v1049
        %v1562 = vmul.f32 %v538, %v1050
        %v1563 = vmul.f32 %v539, %v1051
        %v1564 = vmul.f32 %v540, %v1052
        %v1565 = vmul.f32 %v541, %v1053
        %v1566 = vmul.f32 %v542, %v1054
        %v1567 = vmul.f32 %v543, %v1055
        %v1568 = vmul.f32 %v544, %v1056
        %v1569 = vmul.f32 %v545, %v1057
        %v1570 = vmul.f32 %v546, %v1058
        %v1571 = vmul.f32 %v547, %v1059
        %v1572 = vmul.f32 %v548, %v1060
        %v1573 = vmul.f32 %v549, %v1061
        %v1574 = vmul.f32 %v550, %v1062
        %v1575 = vmul.f32 %v551, %v1063
        %v1576 = vmul.f32 %v552, %v1064
        %v1577 = vmul.f32 %v553, %v1065
        %v1578 = vmul.f32 %v554, %v1066
        %v1579 = vmul.f32 %v555, %v1067
        %v1580 = vmul.f32 %v556, %v1068
        %v1581 = vmul.f32 %v557, %v1069
        %v1582 = vmul.f32 %v558, %v1070
        %v1583 = vmul.f32 %v559, %v1071
        %v1584 = vmul.f32 %v560, %v1072
        %v1585 = vmul.f32 %v561, %v1073
        %v1586 = vmul.f32 %v562, %v1074
        %v1587 = vmul.f32 %v563, %v1075
        %v1588 = vmul.f32 %v564, %v1076
        %v1589 = vmul.f32 %v565, %v1077
        %v1590 = vmul.f32 %v566, %v1078
        %v1591 = vmul.f32 %v567, %v1079
        %v1592 = vmul.f32 %v568, %v1080
        %v1593 = vmul.f32 %v569, %v1081
        %v1594 = vmul.f32 %v570, %v1082
        %v1595 = vmul.f32 %v571, %v1083
        %v1596 = vmul.f32 %v572, %v1084
        %v1597 = vmul.f32 %v573, %v1085
        %v1598 = vmul.f32 %v574, %v1086
        %v1599 = vmul.f32 %v575, %v1087
        %v1600 = vmul.f32 %v576, %v1088
        %v1601 = vmul.f32 %v577, %v1089
        %v1602 = vmul.f32 %v578, %v1090
        %v1603 = vmul.f32 %v579, %v1091
        %v1604 = vmul.f32 %v580, %v1092
        %v1605 = vmul.f32 %v581, %v1093
        %v1606 = vmul.f32 %v582, %v1094
        %v1607 = vmul.f32 %v583, %v1095
        %v1608 = vmul.f32 %v584, %v1096
        %v1609 = vmul.f32 %v585, %v1097
        %v1610 = vmul.f32 %v586, %v1098
        %v1611 = vmul.f32 %v587, %v1099
        %v1612 = vmul.f32 %v588, %v1100
        %v1613 = vmul.f32 %v589, %v1101
        %v1614 = vmul.f32 %v590, %v1102
        %v1615 = vmul.f32 %v591, %v1103
        %v1616 = vmul.f32 %v592, %v1104
        %v1617 = vmul.f32 %v593, %v1105
        %v1618 = vmul.f32 %v594, %v1106
        %v1619 = vmul.f32 %v595, %v1107
        %v1620 = vmul.f32 %v596, %v1108
        %v1621 = vmul.f32 %v597, %v1109
        %v1622 = vmul.f32 %v598, %v1110
        %v1623 = vmul.f32 %v599, %v1111
        %v1624 = vmul.f32 %v600, %v1112
        %v1625 = vmul.f32 %v601, %v1113
        %v1626 = vmul.f32 %v602, %v1114
        %v1627 = vmul.f32 %v603, %v1115
        %v1628 = vmul.f32 %v604, %v1116
        %v1629 = vmul.f32 %v605, %v1117
        %v1630 = vmul.f32 %v606, %v1118
        %v1631 = vmul.f32 %v607, %v1119
        %v1632 = vmul.f32 %v608, %v1120
        %v1633 = vmul.f32 %v609, %v1121
        %v1634 = vmul.f32 %v610, %v1122
        %v1635 = vmul.f32 %v611, %v1123
        %v1636 = vmul.f32 %v612, %v1124
        %v1637 = vmul.f32 %v613, %v1125
        %v1638 = vmul.f32 %v614, %v1126
        %v1639 = vmul.f32 %v615, %v1127
        %v1640 = vmul.f32 %v616, %v1128
        %v1641 = vmul.f32 %v617, %v1129
        %v1642 = vmul.f32 %v618, %v1130
        %v1643 = vmul.f32 %v619, %v1131
        %v1644 = vmul.f32 %v620, %v1132
        %v1645 = vmul.f32 %v621, %v1133
        %v1646 = vmul.f32 %v622, %v1134
        %v1647 = vmul.f32 %v623, %v1135
        %v1648 = vmul.f32 %v624, %v1136
        %v1649 = vmul.f32 %v625, %v1137
        %v1650 = vmul.f32 %v626, %v1138
        %v1651 = vmul.f32 %v627, %v1139
        %v1652 = vmul.f32 %v628, %v1140
        %v1653 = vmul.f32 %v629, %v1141
        %v1654 = vmul.f32 %v630, %v1142
        %v1655 = vmul.f32 %v631, %v1143
        %v1656 = vmul.f32 %v632, %v1144
        %v1657 = vmul.f32 %v633, %v1145
        %v1658 = vmul.f32 %v634, %v1146
        %v1659 = vmul.f32 %v635, %v1147
        %v1660 = vmul.f32 %v636, %v1148
        %v1661 = vmul.f32 %v637, %v1149
        %v1662 = vmul.f32 %v638, %v1150
        %v1663 = vmul.f32 %v639, %v1151
        %v1664 = vmul.f32 %v640, %v1152
        %v1665 = vmul.f32 %v641, %v1153
        %v1666 = vmul.f32 %v642, %v1154
        %v1667 = vmul.f32 %v643, %v1155
        %v1668 = vmul.f32 %v644, %v1156
        %v1669 = vmul.f32 %v645, %v1157
        %v1670 = vmul.f32 %v646, %v1158
        %v1671 = vmul.f32 %v647, %v1159
        %v1672 = vmul.f32 %v648, %v1160
        %v1673 = vmul.f32 %v649, %v1161
        %v1674 = vmul.f32 %v650, %v1162
        %v1675 = vmul.f32 %v651, %v1163
        %v1676 = vmul.f32 %v652, %v1164
        %v1677 = vmul.f32 %v653, %v1165
        %v1678 = vmul.f32 %v654, %v1166
        %v1679 = vmul.f32 %v655, %v1167
        %v1680 = vmul.f32 %v656, %v1168
        %v1681 = vmul.f32 %v657, %v1169
        %v1682 = vmul.f32 %v658, %v1170
        %v1683 = vmul.f32 %v659, %v1171
        %v1684 = vmul.f32 %v660, %v1172
        %v1685 = vmul.f32 %v661, %v1173
        %v1686 = vmul.f32 %v662, %v1174
        %v1687 = vmul.f32 %v663, %v1175
        %v1688 = vmul.f32 %v664, %v1176
        %v1689 = vmul.f32 %v665, %v1177
        %v1690 = vmul.f32 %v666, %v1178
        %v1691 = vmul.f32 %v667, %v1179
        %v1692 = vmul.f32 %v668, %v1180
        %v1693 = vmul.f32 %v669, %v1181
        %v1694 = vmul.f32 %v670, %v1182
        %v1695 = vmul.f32 %v671, %v1183
        %v1696 = vmul.f32 %v672, %v1184
        %v1697 = vmul.f32 %v673, %v1185
        %v1698 = vmul.f32 %v674, %v1186
        %v1699 = vmul.f32 %v675, %v1187
        %v1700 = vmul.f32 %v676, %v1188
        %v1701 = vmul.f32 %v677, %v1189
        %v1702 = vmul.f32 %v678, %v1190
        %v1703 = vmul.f32 %v679, %v1191
        %v1704 = vmul.f32 %v680, %v1192
        %v1705 = vmul.f32 %v681, %v1193
        %v1706 = vmul.f32 %v682, %v1194
        %v1707 = vmul.f32 %v683, %v1195
        %v1708 = vmul.f32 %v684, %v1196
        %v1709 = vmul.f32 %v685, %v1197
        %v1710 = vmul.f32 %v686, %v1198
        %v1711 = vmul.f32 %v687, %v1199
        %v1712 = vmul.f32 %v688, %v1200
        %v1713 = vmul.f32 %v689, %v1201
        %v1714 = vmul.f32 %v690, %v1202
        %v1715 = vmul.f32 %v691, %v1203
        %v1716 = vmul.f32 %v692, %v1204
        %v1717 = vmul.f32 %v693, %v1205
        %v1718 = vmul.f32 %v694, %v1206
        %v1719 = vmul.f32 %v695, %v1207
        %v1720 = vmul.f32 %v696, %v1208
        %v1721 = vmul.f32 %v697, %v1209
        %v1722 = vmul.f32 %v698, %v1210
        %v1723 = vmul.f32 %v699, %v1211
        %v1724 = vmul.f32 %v700, %v1212
        %v1725 = vmul.f32 %v701, %v1213
        %v1726 = vmul.f32 %v702, %v1214
        %v1727 = vmul.f32 %v703, %v1215
        %v1728 = vmul.f32 %v704, %v1216
        %v1729 = vmul.f32 %v705, %v1217
        %v1730 = vmul.f32 %v706, %v1218
        %v1731 = vmul.f32 %v707, %v1219
        %v1732 = vmul.f32 %v708, %v1220
        %v1733 = vmul.f32 %v709, %v1221
        %v1734 = vmul.f32 %v710, %v1222
        %v1735 = vmul.f32 %v711, %v1223
        %v1736 = vmul.f32 %v712, %v1224
        %v1737 = vmul.f32 %v713, %v1225
        %v1738 = vmul.f32 %v714, %v1226
        %v1739 = vmul.f32 %v715, %v1227
        %v1740 = vmul.f32 %v716, %v1228
        %v1741 = vmul.f32 %v717, %v1229
        %v1742 = vmul.f32 %v718, %v1230
        %1743 = vst [vmem:[%s203] sm:$0xff] %v1231
        %1744 = vst [vmem:[%s203 + $0x8] sm:$0xff] %v1232
        %1745 = vst [vmem:[%s203 + $0x10] sm:$0xff] %v1233
        %1746 = vst [vmem:[%s203 + $0x18] sm:$0xff] %v1234
        %1747 = vst [vmem:[%s203 + $0x20] sm:$0xff] %v1235
        %1748 = vst [vmem:[%s203 + $0x28] sm:$0xff] %v1236
        %1749 = vst [vmem:[%s203 + $0x30] sm:$0xff] %v1237
        %1750 = vst [vmem:[%s203 + $0x38] sm:$0xff] %v1238
        %1751 = vst [vmem:[%s203 + $0x40] sm:$0xff] %v1239
        %1752 = vst [vmem:[%s203 + $0x48] sm:$0xff] %v1240
        %1753 = vst [vmem:[%s203 + $0x50] sm:$0xff] %v1241
        %1754 = vst [vmem:[%s203 + $0x58] sm:$0xff] %v1242
        %1755 = vst [vmem:[%s203 + $0x60] sm:$0xff] %v1243
        %1756 = vst [vmem:[%s203 + $0x68] sm:$0xff] %v1244
        %1757 = vst [vmem:[%s203 + $0x70] sm:$0xff] %v1245
        %1758 = vst [vmem:[%s203 + $0x78] sm:$0xff] %v1246
        %1759 = vst [vmem:[%s203 + $0x80] sm:$0xff] %v1247
        %1760 = vst [vmem:[%s203 + $0x88] sm:$0xff] %v1248
        %1761 = vst [vmem:[%s203 + $0x90] sm:$0xff] %v1249
        %1762 = vst [vmem:[%s203 + $0x98] sm:$0xff] %v1250
        %1763 = vst [vmem:[%s203 + $0xa0] sm:$0xff] %v1251
        %1764 = vst [vmem:[%s203 + $0xa8] sm:$0xff] %v1252
        %1765 = vst [vmem:[%s203 + $0xb0] sm:$0xff] %v1253
        %1766 = vst [vmem:[%s203 + $0xb8] sm:$0xff] %v1254
        %1767 = vst [vmem:[%s203 + $0xc0] sm:$0xff] %v1255
        %1768 = vst [vmem:[%s203 + $0xc8] sm:$0xff] %v1256
        %1769 = vst [vmem:[%s203 + $0xd0] sm:$0xff] %v1257
        %1770 = vst [vmem:[%s203 + $0xd8] sm:$0xff] %v1258
        %1771 = vst [vmem:[%s203 + $0xe0] sm:$0xff] %v1259
        %1772 = vst [vmem:[%s203 + $0xe8] sm:$0xff] %v1260
        %1773 = vst [vmem:[%s203 + $0xf0] sm:$0xff] %v1261
        %1774 = vst [vmem:[%s203 + $0xf8] sm:$0xff] %v1262
        %1775 = vst [vmem:[%s203 + $0x100] sm:$0xff] %v1263
        %1776 = vst [vmem:[%s203 + $0x108] sm:$0xff] %v1264
        %1777 = vst [vmem:[%s203 + $0x110] sm:$0xff] %v1265
        %1778 = vst [vmem:[%s203 + $0x118] sm:$0xff] %v1266
        %1779 = vst [vmem:[%s203 + $0x120] sm:$0xff] %v1267
        %1780 = vst [vmem:[%s203 + $0x128] sm:$0xff] %v1268
        %1781 = vst [vmem:[%s203 + $0x130] sm:$0xff] %v1269
        %1782 = vst [vmem:[%s203 + $0x138] sm:$0xff] %v1270
        %1783 = vst [vmem:[%s203 + $0x140] sm:$0xff] %v1271
        %1784 = vst [vmem:[%s203 + $0x148] sm:$0xff] %v1272
        %1785 = vst [vmem:[%s203 + $0x150] sm:$0xff] %v1273
        %1786 = vst [vmem:[%s203 + $0x158] sm:$0xff] %v1274
        %1787 = vst [vmem:[%s203 + $0x160] sm:$0xff] %v1275
        %1788 = vst [vmem:[%s203 + $0x168] sm:$0xff] %v1276
        %1789 = vst [vmem:[%s203 + $0x170] sm:$0xff] %v1277
        %1790 = vst [vmem:[%s203 + $0x178] sm:$0xff] %v1278
        %1791 = vst [vmem:[%s203 + $0x180] sm:$0xff] %v1279
        %1792 = vst [vmem:[%s203 + $0x188] sm:$0xff] %v1280
        %1793 = vst [vmem:[%s203 + $0x190] sm:$0xff] %v1281
        %1794 = vst [vmem:[%s203 + $0x198] sm:$0xff] %v1282
        %1795 = vst [vmem:[%s203 + $0x1a0] sm:$0xff] %v1283
        %1796 = vst [vmem:[%s203 + $0x1a8] sm:$0xff] %v1284
        %1797 = vst [vmem:[%s203 + $0x1b0] sm:$0xff] %v1285
        %1798 = vst [vmem:[%s203 + $0x1b8] sm:$0xff] %v1286
        %1799 = vst [vmem:[%s203 + $0x1c0] sm:$0xff] %v1287
        %1800 = vst [vmem:[%s203 + $0x1c8] sm:$0xff] %v1288
        %1801 = vst [vmem:[%s203 + $0x1d0] sm:$0xff] %v1289
        %1802 = vst [vmem:[%s203 + $0x1d8] sm:$0xff] %v1290
        %1803 = vst [vmem:[%s203 + $0x1e0] sm:$0xff] %v1291
        %1804 = vst [vmem:[%s203 + $0x1e8] sm:$0xff] %v1292
        %1805 = vst [vmem:[%s203 + $0x1f0] sm:$0xff] %v1293
        %1806 = vst [vmem:[%s203 + $0x1f8] sm:$0xff] %v1294
        %1807 = vst [vmem:[%s203 + $0x200] sm:$0xff] %v1295
        %1808 = vst [vmem:[%s203 + $0x208] sm:$0xff] %v1296
        %1809 = vst [vmem:[%s203 + $0x210] sm:$0xff] %v1297
        %1810 = vst [vmem:[%s203 + $0x218] sm:$0xff] %v1298
        %1811 = vst [vmem:[%s203 + $0x220] sm:$0xff] %v1299
        %1812 = vst [vmem:[%s203 + $0x228] sm:$0xff] %v1300
        %1813 = vst [vmem:[%s203 + $0x230] sm:$0xff] %v1301
        %1814 = vst [vmem:[%s203 + $0x238] sm:$0xff] %v1302
        %1815 = vst [vmem:[%s203 + $0x240] sm:$0xff] %v1303
        %1816 = vst [vmem:[%s203 + $0x248] sm:$0xff] %v1304
        %1817 = vst [vmem:[%s203 + $0x250] sm:$0xff] %v1305
        %1818 = vst [vmem:[%s203 + $0x258] sm:$0xff] %v1306
        %1819 = vst [vmem:[%s203 + $0x260] sm:$0xff] %v1307
        %1820 = vst [vmem:[%s203 + $0x268] sm:$0xff] %v1308
        %1821 = vst [vmem:[%s203 + $0x270] sm:$0xff] %v1309
        %1822 = vst [vmem:[%s203 + $0x278] sm:$0xff] %v1310
        %1823 = vst [vmem:[%s203 + $0x280] sm:$0xff] %v1311
        %1824 = vst [vmem:[%s203 + $0x288] sm:$0xff] %v1312
        %1825 = vst [vmem:[%s203 + $0x290] sm:$0xff] %v1313
        %1826 = vst [vmem:[%s203 + $0x298] sm:$0xff] %v1314
        %1827 = vst [vmem:[%s203 + $0x2a0] sm:$0xff] %v1315
        %1828 = vst [vmem:[%s203 + $0x2a8] sm:$0xff] %v1316
        %1829 = vst [vmem:[%s203 + $0x2b0] sm:$0xff] %v1317
        %1830 = vst [vmem:[%s203 + $0x2b8] sm:$0xff] %v1318
        %1831 = vst [vmem:[%s203 + $0x2c0] sm:$0xff] %v1319
        %1832 = vst [vmem:[%s203 + $0x2c8] sm:$0xff] %v1320
        %1833 = vst [vmem:[%s203 + $0x2d0] sm:$0xff] %v1321
        %1834 = vst [vmem:[%s203 + $0x2d8] sm:$0xff] %v1322
        %1835 = vst [vmem:[%s203 + $0x2e0] sm:$0xff] %v1323
        %1836 = vst [vmem:[%s203 + $0x2e8] sm:$0xff] %v1324
        %1837 = vst [vmem:[%s203 + $0x2f0] sm:$0xff] %v1325
        %1838 = vst [vmem:[%s203 + $0x2f8] sm:$0xff] %v1326
        %1839 = vst [vmem:[%s203 + $0x300] sm:$0xff] %v1327
        %1840 = vst [vmem:[%s203 + $0x308] sm:$0xff] %v1328
        %1841 = vst [vmem:[%s203 + $0x310] sm:$0xff] %v1329
        %1842 = vst [vmem:[%s203 + $0x318] sm:$0xff] %v1330
        %1843 = vst [vmem:[%s203 + $0x320] sm:$0xff] %v1331
        %1844 = vst [vmem:[%s203 + $0x328] sm:$0xff] %v1332
        %1845 = vst [vmem:[%s203 + $0x330] sm:$0xff] %v1333
        %1846 = vst [vmem:[%s203 + $0x338] sm:$0xff] %v1334
        %1847 = vst [vmem:[%s203 + $0x340] sm:$0xff] %v1335
        %1848 = vst [vmem:[%s203 + $0x348] sm:$0xff] %v1336
        %1849 = vst [vmem:[%s203 + $0x350] sm:$0xff] %v1337
        %1850 = vst [vmem:[%s203 + $0x358] sm:$0xff] %v1338
        %1851 = vst [vmem:[%s203 + $0x360] sm:$0xff] %v1339
        %1852 = vst [vmem:[%s203 + $0x368] sm:$0xff] %v1340
        %1853 = vst [vmem:[%s203 + $0x370] sm:$0xff] %v1341
        %1854 = vst [vmem:[%s203 + $0x378] sm:$0xff] %v1342
        %1855 = vst [vmem:[%s203 + $0x380] sm:$0xff] %v1343
        %1856 = vst [vmem:[%s203 + $0x388] sm:$0xff] %v1344
        %1857 = vst [vmem:[%s203 + $0x390] sm:$0xff] %v1345
        %1858 = vst [vmem:[%s203 + $0x398] sm:$0xff] %v1346
        %1859 = vst [vmem:[%s203 + $0x3a0] sm:$0xff] %v1347
        %1860 = vst [vmem:[%s203 + $0x3a8] sm:$0xff] %v1348
        %1861 = vst [vmem:[%s203 + $0x3b0] sm:$0xff] %v1349
        %1862 = vst [vmem:[%s203 + $0x3b8] sm:$0xff] %v1350
        %1863 = vst [vmem:[%s203 + $0x3c0] sm:$0xff] %v1351
        %1864 = vst [vmem:[%s203 + $0x3c8] sm:$0xff] %v1352
        %1865 = vst [vmem:[%s203 + $0x3d0] sm:$0xff] %v1353
        %1866 = vst [vmem:[%s203 + $0x3d8] sm:$0xff] %v1354
        %1867 = vst [vmem:[%s203 + $0x3e0] sm:$0xff] %v1355
        %1868 = vst [vmem:[%s203 + $0x3e8] sm:$0xff] %v1356
        %1869 = vst [vmem:[%s203 + $0x3f0] sm:$0xff] %v1357
        %1870 = vst [vmem:[%s203 + $0x3f8] sm:$0xff] %v1358
        %1871 = vst [vmem:[%s203 + $0x400] sm:$0xff] %v1359
        %1872 = vst [vmem:[%s203 + $0x408] sm:$0xff] %v1360
        %1873 = vst [vmem:[%s203 + $0x410] sm:$0xff] %v1361
        %1874 = vst [vmem:[%s203 + $0x418] sm:$0xff] %v1362
        %1875 = vst [vmem:[%s203 + $0x420] sm:$0xff] %v1363
        %1876 = vst [vmem:[%s203 + $0x428] sm:$0xff] %v1364
        %1877 = vst [vmem:[%s203 + $0x430] sm:$0xff] %v1365
        %1878 = vst [vmem:[%s203 + $0x438] sm:$0xff] %v1366
        %1879 = vst [vmem:[%s203 + $0x440] sm:$0xff] %v1367
        %1880 = vst [vmem:[%s203 + $0x448] sm:$0xff] %v1368
        %1881 = vst [vmem:[%s203 + $0x450] sm:$0xff] %v1369
        %1882 = vst [vmem:[%s203 + $0x458] sm:$0xff] %v1370
        %1883 = vst [vmem:[%s203 + $0x460] sm:$0xff] %v1371
        %1884 = vst [vmem:[%s203 + $0x468] sm:$0xff] %v1372
        %1885 = vst [vmem:[%s203 + $0x470] sm:$0xff] %v1373
        %1886 = vst [vmem:[%s203 + $0x478] sm:$0xff] %v1374
        %1887 = vst [vmem:[%s203 + $0x480] sm:$0xff] %v1375
        %1888 = vst [vmem:[%s203 + $0x488] sm:$0xff] %v1376
        %1889 = vst [vmem:[%s203 + $0x490] sm:$0xff] %v1377
        %1890 = vst [vmem:[%s203 + $0x498] sm:$0xff] %v1378
        %1891 = vst [vmem:[%s203 + $0x4a0] sm:$0xff] %v1379
        %1892 = vst [vmem:[%s203 + $0x4a8] sm:$0xff] %v1380
        %1893 = vst [vmem:[%s203 + $0x4b0] sm:$0xff] %v1381
        %1894 = vst [vmem:[%s203 + $0x4b8] sm:$0xff] %v1382
        %1895 = vst [vmem:[%s203 + $0x4c0] sm:$0xff] %v1383
        %1896 = vst [vmem:[%s203 + $0x4c8] sm:$0xff] %v1384
        %1897 = vst [vmem:[%s203 + $0x4d0] sm:$0xff] %v1385
        %1898 = vst [vmem:[%s203 + $0x4d8] sm:$0xff] %v1386
        %1899 = vst [vmem:[%s203 + $0x4e0] sm:$0xff] %v1387
        %1900 = vst [vmem:[%s203 + $0x4e8] sm:$0xff] %v1388
        %1901 = vst [vmem:[%s203 + $0x4f0] sm:$0xff] %v1389
        %1902 = vst [vmem:[%s203 + $0x4f8] sm:$0xff] %v1390
        %1903 = vst [vmem:[%s203 + $0x500] sm:$0xff] %v1391
        %1904 = vst [vmem:[%s203 + $0x508] sm:$0xff] %v1392
        %1905 = vst [vmem:[%s203 + $0x510] sm:$0xff] %v1393
        %1906 = vst [vmem:[%s203 + $0x518] sm:$0xff] %v1394
        %1907 = vst [vmem:[%s203 + $0x520] sm:$0xff] %v1395
        %1908 = vst [vmem:[%s203 + $0x528] sm:$0xff] %v1396
        %1909 = vst [vmem:[%s203 + $0x530] sm:$0xff] %v1397
        %1910 = vst [vmem:[%s203 + $0x538] sm:$0xff] %v1398
        %1911 = vst [vmem:[%s203 + $0x540] sm:$0xff] %v1399
        %1912 = vst [vmem:[%s203 + $0x548] sm:$0xff] %v1400
        %1913 = vst [vmem:[%s203 + $0x550] sm:$0xff] %v1401
        %1914 = vst [vmem:[%s203 + $0x558] sm:$0xff] %v1402
        %1915 = vst [vmem:[%s203 + $0x560] sm:$0xff] %v1403
        %1916 = vst [vmem:[%s203 + $0x568] sm:$0xff] %v1404
        %1917 = vst [vmem:[%s203 + $0x570] sm:$0xff] %v1405
        %1918 = vst [vmem:[%s203 + $0x578] sm:$0xff] %v1406
        %1919 = vst [vmem:[%s203 + $0x580] sm:$0xff] %v1407
        %1920 = vst [vmem:[%s203 + $0x588] sm:$0xff] %v1408
        %1921 = vst [vmem:[%s203 + $0x590] sm:$0xff] %v1409
        %1922 = vst [vmem:[%s203 + $0x598] sm:$0xff] %v1410
        %1923 = vst [vmem:[%s203 + $0x5a0] sm:$0xff] %v1411
        %1924 = vst [vmem:[%s203 + $0x5a8] sm:$0xff] %v1412
        %1925 = vst [vmem:[%s203 + $0x5b0] sm:$0xff] %v1413
        %1926 = vst [vmem:[%s203 + $0x5b8] sm:$0xff] %v1414
        %1927 = vst [vmem:[%s203 + $0x5c0] sm:$0xff] %v1415
        %1928 = vst [vmem:[%s203 + $0x5c8] sm:$0xff] %v1416
        %1929 = vst [vmem:[%s203 + $0x5d0] sm:$0xff] %v1417
        %1930 = vst [vmem:[%s203 + $0x5d8] sm:$0xff] %v1418
        %1931 = vst [vmem:[%s203 + $0x5e0] sm:$0xff] %v1419
        %1932 = vst [vmem:[%s203 + $0x5e8] sm:$0xff] %v1420
        %1933 = vst [vmem:[%s203 + $0x5f0] sm:$0xff] %v1421
        %1934 = vst [vmem:[%s203 + $0x5f8] sm:$0xff] %v1422
        %1935 = vst [vmem:[%s203 + $0x600] sm:$0xff] %v1423
        %1936 = vst [vmem:[%s203 + $0x608] sm:$0xff] %v1424
        %1937 = vst [vmem:[%s203 + $0x610] sm:$0xff] %v1425
        %1938 = vst [vmem:[%s203 + $0x618] sm:$0xff] %v1426
        %1939 = vst [vmem:[%s203 + $0x620] sm:$0xff] %v1427
        %1940 = vst [vmem:[%s203 + $0x628] sm:$0xff] %v1428
        %1941 = vst [vmem:[%s203 + $0x630] sm:$0xff] %v1429
        %1942 = vst [vmem:[%s203 + $0x638] sm:$0xff] %v1430
        %1943 = vst [vmem:[%s203 + $0x640] sm:$0xff] %v1431
        %1944 = vst [vmem:[%s203 + $0x648] sm:$0xff] %v1432
        %1945 = vst [vmem:[%s203 + $0x650] sm:$0xff] %v1433
        %1946 = vst [vmem:[%s203 + $0x658] sm:$0xff] %v1434
        %1947 = vst [vmem:[%s203 + $0x660] sm:$0xff] %v1435
        %1948 = vst [vmem:[%s203 + $0x668] sm:$0xff] %v1436
        %1949 = vst [vmem:[%s203 + $0x670] sm:$0xff] %v1437
        %1950 = vst [vmem:[%s203 + $0x678] sm:$0xff] %v1438
        %1951 = vst [vmem:[%s203 + $0x680] sm:$0xff] %v1439
        %1952 = vst [vmem:[%s203 + $0x688] sm:$0xff] %v1440
        %1953 = vst [vmem:[%s203 + $0x690] sm:$0xff] %v1441
        %1954 = vst [vmem:[%s203 + $0x698] sm:$0xff] %v1442
        %1955 = vst [vmem:[%s203 + $0x6a0] sm:$0xff] %v1443
        %1956 = vst [vmem:[%s203 + $0x6a8] sm:$0xff] %v1444
        %1957 = vst [vmem:[%s203 + $0x6b0] sm:$0xff] %v1445
        %1958 = vst [vmem:[%s203 + $0x6b8] sm:$0xff] %v1446
        %1959 = vst [vmem:[%s203 + $0x6c0] sm:$0xff] %v1447
        %1960 = vst [vmem:[%s203 + $0x6c8] sm:$0xff] %v1448
        %1961 = vst [vmem:[%s203 + $0x6d0] sm:$0xff] %v1449
        %1962 = vst [vmem:[%s203 + $0x6d8] sm:$0xff] %v1450
        %1963 = vst [vmem:[%s203 + $0x6e0] sm:$0xff] %v1451
        %1964 = vst [vmem:[%s203 + $0x6e8] sm:$0xff] %v1452
        %1965 = vst [vmem:[%s203 + $0x6f0] sm:$0xff] %v1453
        %1966 = vst [vmem:[%s203 + $0x6f8] sm:$0xff] %v1454
        %1967 = vst [vmem:[%s203 + $0x700] sm:$0xff] %v1455
        %1968 = vst [vmem:[%s203 + $0x708] sm:$0xff] %v1456
        %1969 = vst [vmem:[%s203 + $0x710] sm:$0xff] %v1457
        %1970 = vst [vmem:[%s203 + $0x718] sm:$0xff] %v1458
        %1971 = vst [vmem:[%s203 + $0x720] sm:$0xff] %v1459
        %1972 = vst [vmem:[%s203 + $0x728] sm:$0xff] %v1460
        %1973 = vst [vmem:[%s203 + $0x730] sm:$0xff] %v1461
        %1974 = vst [vmem:[%s203 + $0x738] sm:$0xff] %v1462
        %1975 = vst [vmem:[%s203 + $0x740] sm:$0xff] %v1463
        %1976 = vst [vmem:[%s203 + $0x748] sm:$0xff] %v1464
        %1977 = vst [vmem:[%s203 + $0x750] sm:$0xff] %v1465
        %1978 = vst [vmem:[%s203 + $0x758] sm:$0xff] %v1466
        %1979 = vst [vmem:[%s203 + $0x760] sm:$0xff] %v1467
        %1980 = vst [vmem:[%s203 + $0x768] sm:$0xff] %v1468
        %1981 = vst [vmem:[%s203 + $0x770] sm:$0xff] %v1469
        %1982 = vst [vmem:[%s203 + $0x778] sm:$0xff] %v1470
        %1983 = vst [vmem:[%s203 + $0x780] sm:$0xff] %v1471
        %1984 = vst [vmem:[%s203 + $0x788] sm:$0xff] %v1472
        %1985 = vst [vmem:[%s203 + $0x790] sm:$0xff] %v1473
        %1986 = vst [vmem:[%s203 + $0x798] sm:$0xff] %v1474
        %1987 = vst [vmem:[%s203 + $0x7a0] sm:$0xff] %v1475
        %1988 = vst [vmem:[%s203 + $0x7a8] sm:$0xff] %v1476
        %1989 = vst [vmem:[%s203 + $0x7b0] sm:$0xff] %v1477
        %1990 = vst [vmem:[%s203 + $0x7b8] sm:$0xff] %v1478
        %1991 = vst [vmem:[%s203 + $0x7c0] sm:$0xff] %v1479
        %1992 = vst [vmem:[%s203 + $0x7c8] sm:$0xff] %v1480
        %1993 = vst [vmem:[%s203 + $0x7d0] sm:$0xff] %v1481
        %1994 = vst [vmem:[%s203 + $0x7d8] sm:$0xff] %v1482
        %1995 = vst [vmem:[%s203 + $0x7e0] sm:$0xff] %v1483
        %1996 = vst [vmem:[%s203 + $0x7e8] sm:$0xff] %v1484
        %1997 = vst [vmem:[%s203 + $0x7f0] sm:$0xff] %v1485
        %1998 = vst [vmem:[%s203 + $0x7f8] sm:$0xff] %v1486
        %1999 = vst [vmem:[%s203 + $0x800] sm:$0xff] %v1487
        %2000 = vst [vmem:[%s203 + $0x808] sm:$0xff] %v1488
        %2001 = vst [vmem:[%s203 + $0x810] sm:$0xff] %v1489
        %2002 = vst [vmem:[%s203 + $0x818] sm:$0xff] %v1490
        %2003 = vst [vmem:[%s203 + $0x820] sm:$0xff] %v1491
        %2004 = vst [vmem:[%s203 + $0x828] sm:$0xff] %v1492
        %2005 = vst [vmem:[%s203 + $0x830] sm:$0xff] %v1493
        %2006 = vst [vmem:[%s203 + $0x838] sm:$0xff] %v1494
        %2007 = vst [vmem:[%s203 + $0x840] sm:$0xff] %v1495
        %2008 = vst [vmem:[%s203 + $0x848] sm:$0xff] %v1496
        %2009 = vst [vmem:[%s203 + $0x850] sm:$0xff] %v1497
        %2010 = vst [vmem:[%s203 + $0x858] sm:$0xff] %v1498
        %2011 = vst [vmem:[%s203 + $0x860] sm:$0xff] %v1499
        %2012 = vst [vmem:[%s203 + $0x868] sm:$0xff] %v1500
        %2013 = vst [vmem:[%s203 + $0x870] sm:$0xff] %v1501
        %2014 = vst [vmem:[%s203 + $0x878] sm:$0xff] %v1502
        %2015 = vst [vmem:[%s203 + $0x880] sm:$0xff] %v1503
        %2016 = vst [vmem:[%s203 + $0x888] sm:$0xff] %v1504
        %2017 = vst [vmem:[%s203 + $0x890] sm:$0xff] %v1505
        %2018 = vst [vmem:[%s203 + $0x898] sm:$0xff] %v1506
        %2019 = vst [vmem:[%s203 + $0x8a0] sm:$0xff] %v1507
        %2020 = vst [vmem:[%s203 + $0x8a8] sm:$0xff] %v1508
        %2021 = vst [vmem:[%s203 + $0x8b0] sm:$0xff] %v1509
        %2022 = vst [vmem:[%s203 + $0x8b8] sm:$0xff] %v1510
        %2023 = vst [vmem:[%s203 + $0x8c0] sm:$0xff] %v1511
        %2024 = vst [vmem:[%s203 + $0x8c8] sm:$0xff] %v1512
        %2025 = vst [vmem:[%s203 + $0x8d0] sm:$0xff] %v1513
        %2026 = vst [vmem:[%s203 + $0x8d8] sm:$0xff] %v1514
        %2027 = vst [vmem:[%s203 + $0x8e0] sm:$0xff] %v1515
        %2028 = vst [vmem:[%s203 + $0x8e8] sm:$0xff] %v1516
        %2029 = vst [vmem:[%s203 + $0x8f0] sm:$0xff] %v1517
        %2030 = vst [vmem:[%s203 + $0x8f8] sm:$0xff] %v1518
        %2031 = vst [vmem:[%s203 + $0x900] sm:$0xff] %v1519
        %2032 = vst [vmem:[%s203 + $0x908] sm:$0xff] %v1520
        %2033 = vst [vmem:[%s203 + $0x910] sm:$0xff] %v1521
        %2034 = vst [vmem:[%s203 + $0x918] sm:$0xff] %v1522
        %2035 = vst [vmem:[%s203 + $0x920] sm:$0xff] %v1523
        %2036 = vst [vmem:[%s203 + $0x928] sm:$0xff] %v1524
        %2037 = vst [vmem:[%s203 + $0x930] sm:$0xff] %v1525
        %2038 = vst [vmem:[%s203 + $0x938] sm:$0xff] %v1526
        %2039 = vst [vmem:[%s203 + $0x940] sm:$0xff] %v1527
        %2040 = vst [vmem:[%s203 + $0x948] sm:$0xff] %v1528
        %2041 = vst [vmem:[%s203 + $0x950] sm:$0xff] %v1529
        %2042 = vst [vmem:[%s203 + $0x958] sm:$0xff] %v1530
        %2043 = vst [vmem:[%s203 + $0x960] sm:$0xff] %v1531
        %2044 = vst [vmem:[%s203 + $0x968] sm:$0xff] %v1532
        %2045 = vst [vmem:[%s203 + $0x970] sm:$0xff] %v1533
        %2046 = vst [vmem:[%s203 + $0x978] sm:$0xff] %v1534
        %2047 = vst [vmem:[%s203 + $0x980] sm:$0xff] %v1535
        %2048 = vst [vmem:[%s203 + $0x988] sm:$0xff] %v1536
        %2049 = vst [vmem:[%s203 + $0x990] sm:$0xff] %v1537
        %2050 = vst [vmem:[%s203 + $0x998] sm:$0xff] %v1538
        %2051 = vst [vmem:[%s203 + $0x9a0] sm:$0xff] %v1539
        %2052 = vst [vmem:[%s203 + $0x9a8] sm:$0xff] %v1540
        %2053 = vst [vmem:[%s203 + $0x9b0] sm:$0xff] %v1541
        %2054 = vst [vmem:[%s203 + $0x9b8] sm:$0xff] %v1542
        %2055 = vst [vmem:[%s203 + $0x9c0] sm:$0xff] %v1543
        %2056 = vst [vmem:[%s203 + $0x9c8] sm:$0xff] %v1544
        %2057 = vst [vmem:[%s203 + $0x9d0] sm:$0xff] %v1545
        %2058 = vst [vmem:[%s203 + $0x9d8] sm:$0xff] %v1546
        %2059 = vst [vmem:[%s203 + $0x9e0] sm:$0xff] %v1547
        %2060 = vst [vmem:[%s203 + $0x9e8] sm:$0xff] %v1548
        %2061 = vst [vmem:[%s203 + $0x9f0] sm:$0xff] %v1549
        %2062 = vst [vmem:[%s203 + $0x9f8] sm:$0xff] %v1550
        %2063 = vst [vmem:[%s203 + $0xa00] sm:$0xff] %v1551
        %2064 = vst [vmem:[%s203 + $0xa08] sm:$0xff] %v1552
        %2065 = vst [vmem:[%s203 + $0xa10] sm:$0xff] %v1553
        %2066 = vst [vmem:[%s203 + $0xa18] sm:$0xff] %v1554
        %2067 = vst [vmem:[%s203 + $0xa20] sm:$0xff] %v1555
        %2068 = vst [vmem:[%s203 + $0xa28] sm:$0xff] %v1556
        %2069 = vst [vmem:[%s203 + $0xa30] sm:$0xff] %v1557
        %2070 = vst [vmem:[%s203 + $0xa38] sm:$0xff] %v1558
        %2071 = vst [vmem:[%s203 + $0xa40] sm:$0xff] %v1559
        %2072 = vst [vmem:[%s203 + $0xa48] sm:$0xff] %v1560
        %2073 = vst [vmem:[%s203 + $0xa50] sm:$0xff] %v1561
        %2074 = vst [vmem:[%s203 + $0xa58] sm:$0xff] %v1562
        %2075 = vst [vmem:[%s203 + $0xa60] sm:$0xff] %v1563
        %2076 = vst [vmem:[%s203 + $0xa68] sm:$0xff] %v1564
        %2077 = vst [vmem:[%s203 + $0xa70] sm:$0xff] %v1565
        %2078 = vst [vmem:[%s203 + $0xa78] sm:$0xff] %v1566
        %2079 = vst [vmem:[%s203 + $0xa80] sm:$0xff] %v1567
        %2080 = vst [vmem:[%s203 + $0xa88] sm:$0xff] %v1568
        %2081 = vst [vmem:[%s203 + $0xa90] sm:$0xff] %v1569
        %2082 = vst [vmem:[%s203 + $0xa98] sm:$0xff] %v1570
        %2083 = vst [vmem:[%s203 + $0xaa0] sm:$0xff] %v1571
        %2084 = vst [vmem:[%s203 + $0xaa8] sm:$0xff] %v1572
        %2085 = vst [vmem:[%s203 + $0xab0] sm:$0xff] %v1573
        %2086 = vst [vmem:[%s203 + $0xab8] sm:$0xff] %v1574
        %2087 = vst [vmem:[%s203 + $0xac0] sm:$0xff] %v1575
        %2088 = vst [vmem:[%s203 + $0xac8] sm:$0xff] %v1576
        %2089 = vst [vmem:[%s203 + $0xad0] sm:$0xff] %v1577
        %2090 = vst [vmem:[%s203 + $0xad8] sm:$0xff] %v1578
        %2091 = vst [vmem:[%s203 + $0xae0] sm:$0xff] %v1579
        %2092 = vst [vmem:[%s203 + $0xae8] sm:$0xff] %v1580
        %2093 = vst [vmem:[%s203 + $0xaf0] sm:$0xff] %v1581
        %2094 = vst [vmem:[%s203 + $0xaf8] sm:$0xff] %v1582
        %2095 = vst [vmem:[%s203 + $0xb00] sm:$0xff] %v1583
        %2096 = vst [vmem:[%s203 + $0xb08] sm:$0xff] %v1584
        %2097 = vst [vmem:[%s203 + $0xb10] sm:$0xff] %v1585
        %2098 = vst [vmem:[%s203 + $0xb18] sm:$0xff] %v1586
        %2099 = vst [vmem:[%s203 + $0xb20] sm:$0xff] %v1587
        %2100 = vst [vmem:[%s203 + $0xb28] sm:$0xff] %v1588
        %2101 = vst [vmem:[%s203 + $0xb30] sm:$0xff] %v1589
        %2102 = vst [vmem:[%s203 + $0xb38] sm:$0xff] %v1590
        %2103 = vst [vmem:[%s203 + $0xb40] sm:$0xff] %v1591
        %2104 = vst [vmem:[%s203 + $0xb48] sm:$0xff] %v1592
        %2105 = vst [vmem:[%s203 + $0xb50] sm:$0xff] %v1593
        %2106 = vst [vmem:[%s203 + $0xb58] sm:$0xff] %v1594
        %2107 = vst [vmem:[%s203 + $0xb60] sm:$0xff] %v1595
        %2108 = vst [vmem:[%s203 + $0xb68] sm:$0xff] %v1596
        %2109 = vst [vmem:[%s203 + $0xb70] sm:$0xff] %v1597
        %2110 = vst [vmem:[%s203 + $0xb78] sm:$0xff] %v1598
        %2111 = vst [vmem:[%s203 + $0xb80] sm:$0xff] %v1599
        %2112 = vst [vmem:[%s203 + $0xb88] sm:$0xff] %v1600
        %2113 = vst [vmem:[%s203 + $0xb90] sm:$0xff] %v1601
        %2114 = vst [vmem:[%s203 + $0xb98] sm:$0xff] %v1602
        %2115 = vst [vmem:[%s203 + $0xba0] sm:$0xff] %v1603
        %2116 = vst [vmem:[%s203 + $0xba8] sm:$0xff] %v1604
        %2117 = vst [vmem:[%s203 + $0xbb0] sm:$0xff] %v1605
        %2118 = vst [vmem:[%s203 + $0xbb8] sm:$0xff] %v1606
        %2119 = vst [vmem:[%s203 + $0xbc0] sm:$0xff] %v1607
        %2120 = vst [vmem:[%s203 + $0xbc8] sm:$0xff] %v1608
        %2121 = vst [vmem:[%s203 + $0xbd0] sm:$0xff] %v1609
        %2122 = vst [vmem:[%s203 + $0xbd8] sm:$0xff] %v1610
        %2123 = vst [vmem:[%s203 + $0xbe0] sm:$0xff] %v1611
        %2124 = vst [vmem:[%s203 + $0xbe8] sm:$0xff] %v1612
        %2125 = vst [vmem:[%s203 + $0xbf0] sm:$0xff] %v1613
        %2126 = vst [vmem:[%s203 + $0xbf8] sm:$0xff] %v1614
        %2127 = vst [vmem:[%s203 + $0xc00] sm:$0xff] %v1615
        %2128 = vst [vmem:[%s203 + $0xc08] sm:$0xff] %v1616
        %2129 = vst [vmem:[%s203 + $0xc10] sm:$0xff] %v1617
        %2130 = vst [vmem:[%s203 + $0xc18] sm:$0xff] %v1618
        %2131 = vst [vmem:[%s203 + $0xc20] sm:$0xff] %v1619
        %2132 = vst [vmem:[%s203 + $0xc28] sm:$0xff] %v1620
        %2133 = vst [vmem:[%s203 + $0xc30] sm:$0xff] %v1621
        %2134 = vst [vmem:[%s203 + $0xc38] sm:$0xff] %v1622
        %2135 = vst [vmem:[%s203 + $0xc40] sm:$0xff] %v1623
        %2136 = vst [vmem:[%s203 + $0xc48] sm:$0xff] %v1624
        %2137 = vst [vmem:[%s203 + $0xc50] sm:$0xff] %v1625
        %2138 = vst [vmem:[%s203 + $0xc58] sm:$0xff] %v1626
        %2139 = vst [vmem:[%s203 + $0xc60] sm:$0xff] %v1627
        %2140 = vst [vmem:[%s203 + $0xc68] sm:$0xff] %v1628
        %2141 = vst [vmem:[%s203 + $0xc70] sm:$0xff] %v1629
        %2142 = vst [vmem:[%s203 + $0xc78] sm:$0xff] %v1630
        %2143 = vst [vmem:[%s203 + $0xc80] sm:$0xff] %v1631
        %2144 = vst [vmem:[%s203 + $0xc88] sm:$0xff] %v1632
        %2145 = vst [vmem:[%s203 + $0xc90] sm:$0xff] %v1633
        %2146 = vst [vmem:[%s203 + $0xc98] sm:$0xff] %v1634
        %2147 = vst [vmem:[%s203 + $0xca0] sm:$0xff] %v1635
        %2148 = vst [vmem:[%s203 + $0xca8] sm:$0xff] %v1636
        %2149 = vst [vmem:[%s203 + $0xcb0] sm:$0xff] %v1637
        %2150 = vst [vmem:[%s203 + $0xcb8] sm:$0xff] %v1638
        %2151 = vst [vmem:[%s203 + $0xcc0] sm:$0xff] %v1639
        %2152 = vst [vmem:[%s203 + $0xcc8] sm:$0xff] %v1640
        %2153 = vst [vmem:[%s203 + $0xcd0] sm:$0xff] %v1641
        %2154 = vst [vmem:[%s203 + $0xcd8] sm:$0xff] %v1642
        %2155 = vst [vmem:[%s203 + $0xce0] sm:$0xff] %v1643
        %2156 = vst [vmem:[%s203 + $0xce8] sm:$0xff] %v1644
        %2157 = vst [vmem:[%s203 + $0xcf0] sm:$0xff] %v1645
        %2158 = vst [vmem:[%s203 + $0xcf8] sm:$0xff] %v1646
        %2159 = vst [vmem:[%s203 + $0xd00] sm:$0xff] %v1647
        %2160 = vst [vmem:[%s203 + $0xd08] sm:$0xff] %v1648
        %2161 = vst [vmem:[%s203 + $0xd10] sm:$0xff] %v1649
        %2162 = vst [vmem:[%s203 + $0xd18] sm:$0xff] %v1650
        %2163 = vst [vmem:[%s203 + $0xd20] sm:$0xff] %v1651
        %2164 = vst [vmem:[%s203 + $0xd28] sm:$0xff] %v1652
        %2165 = vst [vmem:[%s203 + $0xd30] sm:$0xff] %v1653
        %2166 = vst [vmem:[%s203 + $0xd38] sm:$0xff] %v1654
        %2167 = vst [vmem:[%s203 + $0xd40] sm:$0xff] %v1655
        %2168 = vst [vmem:[%s203 + $0xd48] sm:$0xff] %v1656
        %2169 = vst [vmem:[%s203 + $0xd50] sm:$0xff] %v1657
        %2170 = vst [vmem:[%s203 + $0xd58] sm:$0xff] %v1658
        %2171 = vst [vmem:[%s203 + $0xd60] sm:$0xff] %v1659
        %2172 = vst [vmem:[%s203 + $0xd68] sm:$0xff] %v1660
        %2173 = vst [vmem:[%s203 + $0xd70] sm:$0xff] %v1661
        %2174 = vst [vmem:[%s203 + $0xd78] sm:$0xff] %v1662
        %2175 = vst [vmem:[%s203 + $0xd80] sm:$0xff] %v1663
        %2176 = vst [vmem:[%s203 + $0xd88] sm:$0xff] %v1664
        %2177 = vst [vmem:[%s203 + $0xd90] sm:$0xff] %v1665
        %2178 = vst [vmem:[%s203 + $0xd98] sm:$0xff] %v1666
        %2179 = vst [vmem:[%s203 + $0xda0] sm:$0xff] %v1667
        %2180 = vst [vmem:[%s203 + $0xda8] sm:$0xff] %v1668
        %2181 = vst [vmem:[%s203 + $0xdb0] sm:$0xff] %v1669
        %2182 = vst [vmem:[%s203 + $0xdb8] sm:$0xff] %v1670
        %2183 = vst [vmem:[%s203 + $0xdc0] sm:$0xff] %v1671
        %2184 = vst [vmem:[%s203 + $0xdc8] sm:$0xff] %v1672
        %2185 = vst [vmem:[%s203 + $0xdd0] sm:$0xff] %v1673
        %2186 = vst [vmem:[%s203 + $0xdd8] sm:$0xff] %v1674
        %2187 = vst [vmem:[%s203 + $0xde0] sm:$0xff] %v1675
        %2188 = vst [vmem:[%s203 + $0xde8] sm:$0xff] %v1676
        %2189 = vst [vmem:[%s203 + $0xdf0] sm:$0xff] %v1677
        %2190 = vst [vmem:[%s203 + $0xdf8] sm:$0xff] %v1678
        %2191 = vst [vmem:[%s203 + $0xe00] sm:$0xff] %v1679
        %2192 = vst [vmem:[%s203 + $0xe08] sm:$0xff] %v1680
        %2193 = vst [vmem:[%s203 + $0xe10] sm:$0xff] %v1681
        %2194 = vst [vmem:[%s203 + $0xe18] sm:$0xff] %v1682
        %2195 = vst [vmem:[%s203 + $0xe20] sm:$0xff] %v1683
        %2196 = vst [vmem:[%s203 + $0xe28] sm:$0xff] %v1684
        %2197 = vst [vmem:[%s203 + $0xe30] sm:$0xff] %v1685
        %2198 = vst [vmem:[%s203 + $0xe38] sm:$0xff] %v1686
        %2199 = vst [vmem:[%s203 + $0xe40] sm:$0xff] %v1687
        %2200 = vst [vmem:[%s203 + $0xe48] sm:$0xff] %v1688
        %2201 = vst [vmem:[%s203 + $0xe50] sm:$0xff] %v1689
        %2202 = vst [vmem:[%s203 + $0xe58] sm:$0xff] %v1690
        %2203 = vst [vmem:[%s203 + $0xe60] sm:$0xff] %v1691
        %2204 = vst [vmem:[%s203 + $0xe68] sm:$0xff] %v1692
        %2205 = vst [vmem:[%s203 + $0xe70] sm:$0xff] %v1693
        %2206 = vst [vmem:[%s203 + $0xe78] sm:$0xff] %v1694
        %2207 = vst [vmem:[%s203 + $0xe80] sm:$0xff] %v1695
        %2208 = vst [vmem:[%s203 + $0xe88] sm:$0xff] %v1696
        %2209 = vst [vmem:[%s203 + $0xe90] sm:$0xff] %v1697
        %2210 = vst [vmem:[%s203 + $0xe98] sm:$0xff] %v1698
        %2211 = vst [vmem:[%s203 + $0xea0] sm:$0xff] %v1699
        %2212 = vst [vmem:[%s203 + $0xea8] sm:$0xff] %v1700
        %2213 = vst [vmem:[%s203 + $0xeb0] sm:$0xff] %v1701
        %2214 = vst [vmem:[%s203 + $0xeb8] sm:$0xff] %v1702
        %2215 = vst [vmem:[%s203 + $0xec0] sm:$0xff] %v1703
        %2216 = vst [vmem:[%s203 + $0xec8] sm:$0xff] %v1704
        %2217 = vst [vmem:[%s203 + $0xed0] sm:$0xff] %v1705
        %2218 = vst [vmem:[%s203 + $0xed8] sm:$0xff] %v1706
        %2219 = vst [vmem:[%s203 + $0xee0] sm:$0xff] %v1707
        %2220 = vst [vmem:[%s203 + $0xee8] sm:$0xff] %v1708
        %2221 = vst [vmem:[%s203 + $0xef0] sm:$0xff] %v1709
        %2222 = vst [vmem:[%s203 + $0xef8] sm:$0xff] %v1710
        %2223 = vst [vmem:[%s203 + $0xf00] sm:$0xff] %v1711
        %2224 = vst [vmem:[%s203 + $0xf08] sm:$0xff] %v1712
        %2225 = vst [vmem:[%s203 + $0xf10] sm:$0xff] %v1713
        %2226 = vst [vmem:[%s203 + $0xf18] sm:$0xff] %v1714
        %2227 = vst [vmem:[%s203 + $0xf20] sm:$0xff] %v1715
        %2228 = vst [vmem:[%s203 + $0xf28] sm:$0xff] %v1716
        %2229 = vst [vmem:[%s203 + $0xf30] sm:$0xff] %v1717
        %2230 = vst [vmem:[%s203 + $0xf38] sm:$0xff] %v1718
        %2231 = vst [vmem:[%s203 + $0xf40] sm:$0xff] %v1719
        %2232 = vst [vmem:[%s203 + $0xf48] sm:$0xff] %v1720
        %2233 = vst [vmem:[%s203 + $0xf50] sm:$0xff] %v1721
        %2234 = vst [vmem:[%s203 + $0xf58] sm:$0xff] %v1722
        %2235 = vst [vmem:[%s203 + $0xf60] sm:$0xff] %v1723
        %2236 = vst [vmem:[%s203 + $0xf68] sm:$0xff] %v1724
        %2237 = vst [vmem:[%s203 + $0xf70] sm:$0xff] %v1725
        %2238 = vst [vmem:[%s203 + $0xf78] sm:$0xff] %v1726
        %2239 = vst [vmem:[%s203 + $0xf80] sm:$0xff] %v1727
        %2240 = vst [vmem:[%s203 + $0xf88] sm:$0xff] %v1728
        %2241 = vst [vmem:[%s203 + $0xf90] sm:$0xff] %v1729
        %2242 = vst [vmem:[%s203 + $0xf98] sm:$0xff] %v1730
        %2243 = vst [vmem:[%s203 + $0xfa0] sm:$0xff] %v1731
        %2244 = vst [vmem:[%s203 + $0xfa8] sm:$0xff] %v1732
        %2245 = vst [vmem:[%s203 + $0xfb0] sm:$0xff] %v1733
        %2246 = vst [vmem:[%s203 + $0xfb8] sm:$0xff] %v1734
        %2247 = vst [vmem:[%s203 + $0xfc0] sm:$0xff] %v1735
        %2248 = vst [vmem:[%s203 + $0xfc8] sm:$0xff] %v1736
        %2249 = vst [vmem:[%s203 + $0xfd0] sm:$0xff] %v1737
        %2250 = vst [vmem:[%s203 + $0xfd8] sm:$0xff] %v1738
        %2251 = vst [vmem:[%s203 + $0xfe0] sm:$0xff] %v1739
        %2252 = vst [vmem:[%s203 + $0xfe8] sm:$0xff] %v1740
        %2253 = vst [vmem:[%s203 + $0xff0] sm:$0xff] %v1741
        %2254 = vst [vmem:[%s203 + $0xff8] sm:$0xff] %v1742
        %s2255 = sand.u32 %s82, 1
        %s2256 = scalar_lea.sflag [#allocation4], %s2255
        %s2257 = sand.u32 %s82, 1
        %s2258 = smul.addr %s2257, 4096
        %s2259 = scalar_lea.vmem [#allocation7], %s2258
        // Predicated region
        $region37: #{tpu_custom_call.1} parent=27 // pred_check
          %p2260 = pneg %p92
        $region38: #{tpu_custom_call.1} parent=27 // pred_check_branch
          %2262 = sbr.rel (%p2260) target = $region40
        $region39: #{tpu_custom_call.1} parent=27 // pred_region
          %s2263 = smul.u32 32, %s22
          %s2265 = ssub.s32 65536, 65536
          %2266 = vsyncadd %s2256, %s2265
          %s2267 = smul.addr %s2263, 16
          %s2268 = smul.addr %s2267, 128
          %s2269 = scalar_lea.hbm %s2, %s2268
          %s2270 = sshll.u32 %s2259, 4
          %s2271 = int_to_ptr.vmem [resolvable:$true] %s2270
          %2276 = dma.vmem_to_hbm [thread:$0]  %s2271, 65536, %s2269, %s2256, 2048, 2048, 128
        $region40: #{tpu_custom_call.1} parent=27 // pred_fallthru
          _
      $region28: #{tpu_custom_call.1} parent=5 // pred_fallthru
        _
      %p2277 = scmp.le.s32.totalorder 2, %s17
      // Predicated region
      $region41: #{tpu_custom_call.1} parent=5 // pred_check
        %p2278 = pneg %p2277
      $region42: #{tpu_custom_call.1} parent=5 // pred_check_branch
        %2280 = sbr.rel (%p2278) target = $region44
      $region43: #{tpu_custom_call.1} parent=5 // pred_region
        %s2281 = ssub.s32 %s17, 2
        // Predicated region
        $region45: #{tpu_custom_call.1} parent=43 // pred_check
          %p2282 = pneg %p98
        $region46: #{tpu_custom_call.1} parent=43 // pred_check_branch
          %2284 = sbr.rel (%p2282) target = $region48
        $region47: #{tpu_custom_call.1} parent=43 // pred_region
          %s2285 = sand.u32 %s83, 1
          %s2286 = scalar_lea.sflag [#allocation4], %s2285
          %s2287 = sand.u32 %s83, 1
          %s2288 = smul.addr %s2287, 4096
          %s2289 = scalar_lea.vmem [#allocation7], %s2288
          %2290 = dma.done %s2286, 65536
        $region48: #{tpu_custom_call.1} parent=43 // pred_fallthru
          _
      $region44: #{tpu_custom_call.1} parent=5 // pred_fallthru
        _
    $region6: #{tpu_custom_call.1} parent=1 // loop_footer
      %s21 = sadd.s32 1, %s17
    $region7: #{tpu_custom_call.1} parent=1 // loop_footer_branch
      %16 = sbr.rel target = $region3
    $region8: #{tpu_custom_call.1} parent=1 // loop_exit
      _
    %2291 = vsyncpa [#allocation3], 1
    %s2292 = scalar_lea.sflag [#allocation3], 1
    %2293 = vsyncpa %s2292, 1
    %2294 = vsyncpa [#allocation6], 1
    %s2295 = scalar_lea.sflag [#allocation6], 1
    %2296 = vsyncpa %s2295, 1
    %2297 = vsyncpa [#allocation4], 1
    %s2298 = scalar_lea.sflag [#allocation4], 1
    %2299 = vsyncpa %s2298, 1

</llo_original>
